<compile_context>
chip_gen: v5e
topology: v5e:2x2
jax: 0.10.0
libtpu: 0.0.40
codegen_flags: <defaults>
</compile_context>

<pallas_src>
import jax
import jax.numpy as jnp
import numpy as np
from jax.experimental import pallas as pl
from jax.experimental.pallas import tpu as pltpu


H_PAD = 128  # hidden size padded to one full lane slab per gate


def lstm_kernel(x_ref, wih_ref, whh_ref, b_ref, wlin_ref, blin_ref, out_ref,
                gx_ref):
    """Full LSTM recurrence + final Linear + Sigmoid, all resident in VMEM.

    x_ref:    (seq*B, I)      f32   time-major inputs flattened to rows
    wih_ref:  (I, 4*Hp)       f32   transposed, gate-slab-padded weight_ih_l0
    whh_ref:  (Hp, 4*Hp)      f32   transposed, gate-slab-padded weight_hh_l0
    b_ref:    (1, 4*Hp)       f32   b_ih + b_hh, gate-slab padded
    wlin_ref: (Hp, Op)        f32   transposed, padded linear weight
    blin_ref: (1, Op)         f32   padded linear bias
    out_ref:  (B, Op)         f32   sigmoid(linear(h_last)), lane dense
    gx_ref:   (seq*B, 4*Hp)   f32   scratch: precomputed x @ Wih + b
    """
    seq_b = x_ref.shape[0]
    hp = whh_ref.shape[0]            # padded hidden size (128)
    bsz = out_ref.shape[0]           # batch
    seq = seq_b // bsz               # compile-time constant

    # Hoisted input projection: one MXU matmul covers every timestep.
    gx_ref[...] = (
        jnp.dot(x_ref[...], wih_ref[...], preferred_element_type=jnp.float32)
        + b_ref[...]
    )

    whh = whh_ref[...]

    h = jnp.zeros((bsz, hp), jnp.float32)
    c = jnp.zeros((bsz, hp), jnp.float32)

    # seq is static (8): fully unrolled recurrence, static row offsets.
    for t in range(seq):
        # (B, 4*Hp); gate order i, f, g, o (PyTorch convention); each gate a
        # full 128-lane slab so the slices below are whole-vreg views.
        gates = gx_ref[t * bsz:(t + 1) * bsz, :] + jnp.dot(
            h, whh, preferred_element_type=jnp.float32
        )
        sg = jax.nn.sigmoid(gates)           # one full-width EUP dispatch
        i_g = sg[:, 0 * hp:1 * hp]
        f_g = sg[:, 1 * hp:2 * hp]
        o_g = sg[:, 3 * hp:4 * hp]
        g_g = jnp.tanh(gates[:, 2 * hp:3 * hp])
        c = f_g * c + i_g * g_g
        h = o_g * jnp.tanh(c)

    # linear(lstm_out[-1]) -> sigmoid; lane-dense store of the whole (B, Op)
    # block. predictions[-1] row selection happens in the wrapper.
    lin = (
        jnp.dot(h, wlin_ref[...], preferred_element_type=jnp.float32)
        + blin_ref[...]
    )
    out_ref[...] = jax.nn.sigmoid(lin)


def lstm_forward(x2d, wih_p, whh_p, b_p, wlin_p, blin_p, batch_size):
    g = wih_p.shape[1]
    op = wlin_p.shape[1]
    seq_b = x2d.shape[0]
    out = pl.pallas_call(
        lstm_kernel,
        out_shape=jax.ShapeDtypeStruct((batch_size, op), jnp.float32),
        in_specs=[pl.BlockSpec(memory_space=pltpu.MemorySpace.VMEM)] * 6,
        out_specs=pl.BlockSpec(memory_space=pltpu.MemorySpace.VMEM),
        scratch_shapes=[pltpu.VMEM((seq_b, g), jnp.float32)],
    )(x2d, wih_p, whh_p, b_p, wlin_p, blin_p)
    return out  # (batch_size, Op); caller slices real columns / last row


def pack_gate_cols(w_t, h, hp):
    """(rows, 4h) with gates [i|f|g|o] -> (rows, 4hp), each gate its own
    hp-wide (128-lane) slab, zero-padded."""
    rows = w_t.shape[0]
    out = jnp.zeros((rows, 4 * hp), jnp.float32)
    for g in range(4):
        out = out.at[:, g * hp:g * hp + h].set(w_t[:, g * h:(g + 1) * h])
    return out


def reference_forward(x, W_ih, W_hh, b_ih, b_hh, W_lin, b_lin):
    """Pure-JAX reference mirroring the PyTorch module semantics."""
    seq, B, _ = x.shape
    H = W_hh.shape[1]
    h = jnp.zeros((B, H), jnp.float32)
    c = jnp.zeros((B, H), jnp.float32)
    for t in range(seq):
        gates = x[t] @ W_ih.T + b_ih + h @ W_hh.T + b_hh
        i_g = jax.nn.sigmoid(gates[:, 0:H])
        f_g = jax.nn.sigmoid(gates[:, H:2 * H])
        g_g = jnp.tanh(gates[:, 2 * H:3 * H])
        o_g = jax.nn.sigmoid(gates[:, 3 * H:4 * H])
        c = f_g * c + i_g * g_g
        h = o_g * jnp.tanh(c)
    pred = jax.nn.sigmoid(h @ W_lin.T + b_lin)
    return pred[-1]


if __name__ == "__main__":
    # Module hyperparameters (forward implies input_size == 2).
    input_size = 2
    hidden_layer_size = 32
    batch_size = 2
    seq_len = 8

    key = jax.random.PRNGKey(0)
    k_x, k1, k2, k3, k4, k5, k6 = jax.random.split(key, 7)

    # input_seq: (seq_len, batch, 2) — the shape produced by
    # input_seq.reshape(len(input_seq), -1, 2) in the PyTorch forward.
    input_seq = jax.random.normal(
        k_x, (seq_len, batch_size, input_size), jnp.float32)

    # Deterministic PyTorch-style init: U(-1/sqrt(H), 1/sqrt(H)).
    H = hidden_layer_size
    lstm_bound = 1.0 / np.sqrt(H)
    W_ih = jax.random.uniform(k1, (4 * H, input_size), jnp.float32,
                              -lstm_bound, lstm_bound)
    W_hh = jax.random.uniform(k2, (4 * H, H), jnp.float32,
                              -lstm_bound, lstm_bound)
    b_ih = jax.random.uniform(k3, (4 * H,), jnp.float32,
                              -lstm_bound, lstm_bound)
    b_hh = jax.random.uniform(k4, (4 * H,), jnp.float32,
                              -lstm_bound, lstm_bound)

    lin_bound = 1.0 / np.sqrt(H)
    W_lin = jax.random.uniform(k5, (batch_size, H), jnp.float32,
                               -lin_bound, lin_bound)
    b_lin = jax.random.uniform(k6, (batch_size,), jnp.float32,
                               -lin_bound, lin_bound)

    # ---- glue: pack / pad parameters into the lane-aligned kernel layout ----
    Hp = H_PAD
    Op = H_PAD  # pad linear output (batch_size=2) to a full 128-lane slab

    wih_p = pack_gate_cols(jnp.transpose(W_ih), H, Hp)                # (I, 4Hp)
    whh_p = jnp.zeros((Hp, 4 * Hp), jnp.float32).at[:H, :].set(
        pack_gate_cols(jnp.transpose(W_hh), H, Hp))                   # (Hp, 4Hp)
    b_p = pack_gate_cols((b_ih + b_hh)[None, :], H, Hp)               # (1, 4Hp)
    wlin_p = jnp.zeros((Hp, Op), jnp.float32).at[:H, :batch_size].set(
        jnp.transpose(W_lin))                                         # (Hp, Op)
    blin_p = jnp.zeros((1, Op), jnp.float32).at[0, :batch_size].set(b_lin)

    # Flatten time-major input to rows for the hoisted batched input matmul.
    x2d = input_seq.reshape(seq_len * batch_size, input_size)

    out_full = lstm_forward(x2d, wih_p, whh_p, b_p, wlin_p, blin_p, batch_size)
    out_full = jax.block_until_ready(out_full)

    # predictions[-1]: last row, real (un-padded) columns only -> (batch_size,)
    out = out_full[batch_size - 1, :batch_size]

    ref = reference_forward(input_seq, W_ih, W_hh, b_ih, b_hh, W_lin, b_lin)
    np.testing.assert_allclose(np.asarray(out), np.asarray(ref),
                               rtol=1e-5, atol=1e-5)

    print("KERNEL_OK")
</pallas_src>

<mosaic_0001>
module attributes {stable_mosaic.version = 11 : i64} {
  func.func @lstm_kernel(%arg0: memref<16x2xf32, #tpu.memory_space<vmem>>, %arg1: memref<2x512xf32, #tpu.memory_space<vmem>>, %arg2: memref<128x512xf32, #tpu.memory_space<vmem>>, %arg3: memref<1x512xf32, #tpu.memory_space<vmem>>, %arg4: memref<128x128xf32, #tpu.memory_space<vmem>>, %arg5: memref<1x128xf32, #tpu.memory_space<vmem>>, %arg6: memref<2x128xf32, #tpu.memory_space<vmem>>, %arg7: memref<16x512xf32, #tpu.memory_space<vmem>>) attributes {dimension_semantics = [], scalar_prefetch = 0 : i64, scratch_operands = 1 : i64, tpu.core_type = #tpu.core_type<tc>} {
    %c0 = arith.constant 0 : index
    %c0_0 = arith.constant 0 : index
    %0 = vector.load %arg0[%c0, %c0_0] : memref<16x2xf32, #tpu.memory_space<vmem>>, vector<16x2xf32>
    %c0_1 = arith.constant 0 : index
    %c0_2 = arith.constant 0 : index
    %1 = vector.load %arg1[%c0_1, %c0_2] : memref<2x512xf32, #tpu.memory_space<vmem>>, vector<2x512xf32>
    %cst = arith.constant dense<0.000000e+00> : vector<16x512xf32>
    %2 = tpu.matmul %0, %1, %cst {dimension_numbers = #tpu.dot_dimension_numbers<[1], [0], [0], [1], [0, 0, 1, 1], [], []>} : vector<16x2xf32>, vector<2x512xf32>, vector<16x512xf32> -> vector<16x512xf32>
    %c0_3 = arith.constant 0 : index
    %c0_4 = arith.constant 0 : index
    %3 = vector.load %arg3[%c0_3, %c0_4] : memref<1x512xf32, #tpu.memory_space<vmem>>, vector<1x512xf32>
    %4 = vector.broadcast %3 : vector<1x512xf32> to vector<16x512xf32>
    %5 = arith.addf %2, %4 : vector<16x512xf32>
    %c0_5 = arith.constant 0 : index
    %c0_6 = arith.constant 0 : index
    %6 = vector.load %arg7[%c0_5, %c0_6] : memref<16x512xf32, #tpu.memory_space<vmem>>, vector<16x512xf32>
    tpu.vector_store %arg7[%c0_5, %c0_6], %5 {strides = array<i32>} : memref<16x512xf32, #tpu.memory_space<vmem>>, vector<16x512xf32>,
    %c0_7 = arith.constant 0 : index
    %c0_8 = arith.constant 0 : index
    %7 = vector.load %arg2[%c0_7, %c0_8] : memref<128x512xf32, #tpu.memory_space<vmem>>, vector<128x512xf32>
    %cst_9 = arith.constant 0.000000e+00 : f32
    %8 = vector.broadcast %cst_9 : f32 to vector<2x128xf32>
    %cst_10 = arith.constant 0.000000e+00 : f32
    %9 = vector.broadcast %cst_10 : f32 to vector<2x128xf32>
    %c0_11 = arith.constant 0 : index
    %c0_12 = arith.constant 0 : index
    %10 = vector.load %arg7[%c0_11, %c0_12] : memref<16x512xf32, #tpu.memory_space<vmem>>, vector<2x512xf32>
    %cst_13 = arith.constant dense<0.000000e+00> : vector<2x512xf32>
    %11 = tpu.matmul %8, %7, %cst_13 {dimension_numbers = #tpu.dot_dimension_numbers<[1], [0], [0], [1], [0, 0, 1, 1], [], []>} : vector<2x128xf32>, vector<128x512xf32>, vector<2x512xf32> -> vector<2x512xf32>
    %12 = arith.addf %10, %11 : vector<2x512xf32>
    %13 = arith.negf %12 : vector<2x512xf32>
    %14 = math.exp %13 : vector<2x512xf32>
    %cst_14 = arith.constant 1.000000e+00 : f32
    %15 = vector.broadcast %cst_14 : f32 to vector<2x512xf32>
    %16 = arith.addf %15, %14 : vector<2x512xf32>
    %17 = arith.divf %15, %16 : vector<2x512xf32>
    %18 = vector.extract_strided_slice %17 {offsets = [0, 0], sizes = [2, 128], strides = [1, 1]} : vector<2x512xf32> to vector<2x128xf32>
    %19 = vector.extract_strided_slice %17 {offsets = [0, 128], sizes = [2, 128], strides = [1, 1]} : vector<2x512xf32> to vector<2x128xf32>
    %20 = vector.extract_strided_slice %17 {offsets = [0, 384], sizes = [2, 128], strides = [1, 1]} : vector<2x512xf32> to vector<2x128xf32>
    %21 = vector.extract_strided_slice %12 {offsets = [0, 256], sizes = [2, 128], strides = [1, 1]} : vector<2x512xf32> to vector<2x128xf32>
    %22 = math.tanh %21 : vector<2x128xf32>
    %23 = arith.mulf %19, %9 : vector<2x128xf32>
    %24 = arith.mulf %18, %22 : vector<2x128xf32>
    %25 = arith.addf %23, %24 : vector<2x128xf32>
    %26 = math.tanh %25 : vector<2x128xf32>
    %27 = arith.mulf %20, %26 : vector<2x128xf32>
    %c2 = arith.constant 2 : index
    %c0_15 = arith.constant 0 : index
    %28 = vector.load %arg7[%c2, %c0_15] : memref<16x512xf32, #tpu.memory_space<vmem>>, vector<2x512xf32>
    %cst_16 = arith.constant dense<0.000000e+00> : vector<2x512xf32>
    %29 = tpu.matmul %27, %7, %cst_16 {dimension_numbers = #tpu.dot_dimension_numbers<[1], [0], [0], [1], [0, 0, 1, 1], [], []>} : vector<2x128xf32>, vector<128x512xf32>, vector<2x512xf32> -> vector<2x512xf32>
    %30 = arith.addf %28, %29 : vector<2x512xf32>
    %31 = arith.negf %30 : vector<2x512xf32>
    %32 = math.exp %31 : vector<2x512xf32>
    %cst_17 = arith.constant 1.000000e+00 : f32
    %33 = vector.broadcast %cst_17 : f32 to vector<2x512xf32>
    %34 = arith.addf %33, %32 : vector<2x512xf32>
    %35 = arith.divf %33, %34 : vector<2x512xf32>
    %36 = vector.extract_strided_slice %35 {offsets = [0, 0], sizes = [2, 128], strides = [1, 1]} : vector<2x512xf32> to vector<2x128xf32>
    %37 = vector.extract_strided_slice %35 {offsets = [0, 128], sizes = [2, 128], strides = [1, 1]} : vector<2x512xf32> to vector<2x128xf32>
    %38 = vector.extract_strided_slice %35 {offsets = [0, 384], sizes = [2, 128], strides = [1, 1]} : vector<2x512xf32> to vector<2x128xf32>
    %39 = vector.extract_strided_slice %30 {offsets = [0, 256], sizes = [2, 128], strides = [1, 1]} : vector<2x512xf32> to vector<2x128xf32>
    %40 = math.tanh %39 : vector<2x128xf32>
    %41 = arith.mulf %37, %25 : vector<2x128xf32>
    %42 = arith.mulf %36, %40 : vector<2x128xf32>
    %43 = arith.addf %41, %42 : vector<2x128xf32>
    %44 = math.tanh %43 : vector<2x128xf32>
    %45 = arith.mulf %38, %44 : vector<2x128xf32>
    %c4 = arith.constant 4 : index
    %c0_18 = arith.constant 0 : index
    %46 = vector.load %arg7[%c4, %c0_18] : memref<16x512xf32, #tpu.memory_space<vmem>>, vector<2x512xf32>
    %cst_19 = arith.constant dense<0.000000e+00> : vector<2x512xf32>
    %47 = tpu.matmul %45, %7, %cst_19 {dimension_numbers = #tpu.dot_dimension_numbers<[1], [0], [0], [1], [0, 0, 1, 1], [], []>} : vector<2x128xf32>, vector<128x512xf32>, vector<2x512xf32> -> vector<2x512xf32>
    %48 = arith.addf %46, %47 : vector<2x512xf32>
    %49 = arith.negf %48 : vector<2x512xf32>
    %50 = math.exp %49 : vector<2x512xf32>
    %cst_20 = arith.constant 1.000000e+00 : f32
    %51 = vector.broadcast %cst_20 : f32 to vector<2x512xf32>
    %52 = arith.addf %51, %50 : vector<2x512xf32>
    %53 = arith.divf %51, %52 : vector<2x512xf32>
    %54 = vector.extract_strided_slice %53 {offsets = [0, 0], sizes = [2, 128], strides = [1, 1]} : vector<2x512xf32> to vector<2x128xf32>
    %55 = vector.extract_strided_slice %53 {offsets = [0, 128], sizes = [2, 128], strides = [1, 1]} : vector<2x512xf32> to vector<2x128xf32>
    %56 = vector.extract_strided_slice %53 {offsets = [0, 384], sizes = [2, 128], strides = [1, 1]} : vector<2x512xf32> to vector<2x128xf32>
    %57 = vector.extract_strided_slice %48 {offsets = [0, 256], sizes = [2, 128], strides = [1, 1]} : vector<2x512xf32> to vector<2x128xf32>
    %58 = math.tanh %57 : vector<2x128xf32>
    %59 = arith.mulf %55, %43 : vector<2x128xf32>
    %60 = arith.mulf %54, %58 : vector<2x128xf32>
    %61 = arith.addf %59, %60 : vector<2x128xf32>
    %62 = math.tanh %61 : vector<2x128xf32>
    %63 = arith.mulf %56, %62 : vector<2x128xf32>
    %c6 = arith.constant 6 : index
    %c0_21 = arith.constant 0 : index
    %64 = vector.load %arg7[%c6, %c0_21] : memref<16x512xf32, #tpu.memory_space<vmem>>, vector<2x512xf32>
    %cst_22 = arith.constant dense<0.000000e+00> : vector<2x512xf32>
    %65 = tpu.matmul %63, %7, %cst_22 {dimension_numbers = #tpu.dot_dimension_numbers<[1], [0], [0], [1], [0, 0, 1, 1], [], []>} : vector<2x128xf32>, vector<128x512xf32>, vector<2x512xf32> -> vector<2x512xf32>
    %66 = arith.addf %64, %65 : vector<2x512xf32>
    %67 = arith.negf %66 : vector<2x512xf32>
    %68 = math.exp %67 : vector<2x512xf32>
    %cst_23 = arith.constant 1.000000e+00 : f32
    %69 = vector.broadcast %cst_23 : f32 to vector<2x512xf32>
    %70 = arith.addf %69, %68 : vector<2x512xf32>
    %71 = arith.divf %69, %70 : vector<2x512xf32>
    %72 = vector.extract_strided_slice %71 {offsets = [0, 0], sizes = [2, 128], strides = [1, 1]} : vector<2x512xf32> to vector<2x128xf32>
    %73 = vector.extract_strided_slice %71 {offsets = [0, 128], sizes = [2, 128], strides = [1, 1]} : vector<2x512xf32> to vector<2x128xf32>
    %74 = vector.extract_strided_slice %71 {offsets = [0, 384], sizes = [2, 128], strides = [1, 1]} : vector<2x512xf32> to vector<2x128xf32>
    %75 = vector.extract_strided_slice %66 {offsets = [0, 256], sizes = [2, 128], strides = [1, 1]} : vector<2x512xf32> to vector<2x128xf32>
    %76 = math.tanh %75 : vector<2x128xf32>
    %77 = arith.mulf %73, %61 : vector<2x128xf32>
    %78 = arith.mulf %72, %76 : vector<2x128xf32>
    %79 = arith.addf %77, %78 : vector<2x128xf32>
    %80 = math.tanh %79 : vector<2x128xf32>
    %81 = arith.mulf %74, %80 : vector<2x128xf32>
    %c8 = arith.constant 8 : index
    %c0_24 = arith.constant 0 : index
    %82 = vector.load %arg7[%c8, %c0_24] : memref<16x512xf32, #tpu.memory_space<vmem>>, vector<2x512xf32>
    %cst_25 = arith.constant dense<0.000000e+00> : vector<2x512xf32>
    %83 = tpu.matmul %81, %7, %cst_25 {dimension_numbers = #tpu.dot_dimension_numbers<[1], [0], [0], [1], [0, 0, 1, 1], [], []>} : vector<2x128xf32>, vector<128x512xf32>, vector<2x512xf32> -> vector<2x512xf32>
    %84 = arith.addf %82, %83 : vector<2x512xf32>
    %85 = arith.negf %84 : vector<2x512xf32>
    %86 = math.exp %85 : vector<2x512xf32>
    %cst_26 = arith.constant 1.000000e+00 : f32
    %87 = vector.broadcast %cst_26 : f32 to vector<2x512xf32>
    %88 = arith.addf %87, %86 : vector<2x512xf32>
    %89 = arith.divf %87, %88 : vector<2x512xf32>
    %90 = vector.extract_strided_slice %89 {offsets = [0, 0], sizes = [2, 128], strides = [1, 1]} : vector<2x512xf32> to vector<2x128xf32>
    %91 = vector.extract_strided_slice %89 {offsets = [0, 128], sizes = [2, 128], strides = [1, 1]} : vector<2x512xf32> to vector<2x128xf32>
    %92 = vector.extract_strided_slice %89 {offsets = [0, 384], sizes = [2, 128], strides = [1, 1]} : vector<2x512xf32> to vector<2x128xf32>
    %93 = vector.extract_strided_slice %84 {offsets = [0, 256], sizes = [2, 128], strides = [1, 1]} : vector<2x512xf32> to vector<2x128xf32>
    %94 = math.tanh %93 : vector<2x128xf32>
    %95 = arith.mulf %91, %79 : vector<2x128xf32>
    %96 = arith.mulf %90, %94 : vector<2x128xf32>
    %97 = arith.addf %95, %96 : vector<2x128xf32>
    %98 = math.tanh %97 : vector<2x128xf32>
    %99 = arith.mulf %92, %98 : vector<2x128xf32>
    %c10 = arith.constant 10 : index
    %c0_27 = arith.constant 0 : index
    %100 = vector.load %arg7[%c10, %c0_27] : memref<16x512xf32, #tpu.memory_space<vmem>>, vector<2x512xf32>
    %cst_28 = arith.constant dense<0.000000e+00> : vector<2x512xf32>
    %101 = tpu.matmul %99, %7, %cst_28 {dimension_numbers = #tpu.dot_dimension_numbers<[1], [0], [0], [1], [0, 0, 1, 1], [], []>} : vector<2x128xf32>, vector<128x512xf32>, vector<2x512xf32> -> vector<2x512xf32>
    %102 = arith.addf %100, %101 : vector<2x512xf32>
    %103 = arith.negf %102 : vector<2x512xf32>
    %104 = math.exp %103 : vector<2x512xf32>
    %cst_29 = arith.constant 1.000000e+00 : f32
    %105 = vector.broadcast %cst_29 : f32 to vector<2x512xf32>
    %106 = arith.addf %105, %104 : vector<2x512xf32>
    %107 = arith.divf %105, %106 : vector<2x512xf32>
    %108 = vector.extract_strided_slice %107 {offsets = [0, 0], sizes = [2, 128], strides = [1, 1]} : vector<2x512xf32> to vector<2x128xf32>
    %109 = vector.extract_strided_slice %107 {offsets = [0, 128], sizes = [2, 128], strides = [1, 1]} : vector<2x512xf32> to vector<2x128xf32>
    %110 = vector.extract_strided_slice %107 {offsets = [0, 384], sizes = [2, 128], strides = [1, 1]} : vector<2x512xf32> to vector<2x128xf32>
    %111 = vector.extract_strided_slice %102 {offsets = [0, 256], sizes = [2, 128], strides = [1, 1]} : vector<2x512xf32> to vector<2x128xf32>
    %112 = math.tanh %111 : vector<2x128xf32>
    %113 = arith.mulf %109, %97 : vector<2x128xf32>
    %114 = arith.mulf %108, %112 : vector<2x128xf32>
    %115 = arith.addf %113, %114 : vector<2x128xf32>
    %116 = math.tanh %115 : vector<2x128xf32>
    %117 = arith.mulf %110, %116 : vector<2x128xf32>
    %c12 = arith.constant 12 : index
    %c0_30 = arith.constant 0 : index
    %118 = vector.load %arg7[%c12, %c0_30] : memref<16x512xf32, #tpu.memory_space<vmem>>, vector<2x512xf32>
    %cst_31 = arith.constant dense<0.000000e+00> : vector<2x512xf32>
    %119 = tpu.matmul %117, %7, %cst_31 {dimension_numbers = #tpu.dot_dimension_numbers<[1], [0], [0], [1], [0, 0, 1, 1], [], []>} : vector<2x128xf32>, vector<128x512xf32>, vector<2x512xf32> -> vector<2x512xf32>
    %120 = arith.addf %118, %119 : vector<2x512xf32>
    %121 = arith.negf %120 : vector<2x512xf32>
    %122 = math.exp %121 : vector<2x512xf32>
    %cst_32 = arith.constant 1.000000e+00 : f32
    %123 = vector.broadcast %cst_32 : f32 to vector<2x512xf32>
    %124 = arith.addf %123, %122 : vector<2x512xf32>
    %125 = arith.divf %123, %124 : vector<2x512xf32>
    %126 = vector.extract_strided_slice %125 {offsets = [0, 0], sizes = [2, 128], strides = [1, 1]} : vector<2x512xf32> to vector<2x128xf32>
    %127 = vector.extract_strided_slice %125 {offsets = [0, 128], sizes = [2, 128], strides = [1, 1]} : vector<2x512xf32> to vector<2x128xf32>
    %128 = vector.extract_strided_slice %125 {offsets = [0, 384], sizes = [2, 128], strides = [1, 1]} : vector<2x512xf32> to vector<2x128xf32>
    %129 = vector.extract_strided_slice %120 {offsets = [0, 256], sizes = [2, 128], strides = [1, 1]} : vector<2x512xf32> to vector<2x128xf32>
    %130 = math.tanh %129 : vector<2x128xf32>
    %131 = arith.mulf %127, %115 : vector<2x128xf32>
    %132 = arith.mulf %126, %130 : vector<2x128xf32>
    %133 = arith.addf %131, %132 : vector<2x128xf32>
    %134 = math.tanh %133 : vector<2x128xf32>
    %135 = arith.mulf %128, %134 : vector<2x128xf32>
    %c14 = arith.constant 14 : index
    %c0_33 = arith.constant 0 : index
    %136 = vector.load %arg7[%c14, %c0_33] : memref<16x512xf32, #tpu.memory_space<vmem>>, vector<2x512xf32>
    %cst_34 = arith.constant dense<0.000000e+00> : vector<2x512xf32>
    %137 = tpu.matmul %135, %7, %cst_34 {dimension_numbers = #tpu.dot_dimension_numbers<[1], [0], [0], [1], [0, 0, 1, 1], [], []>} : vector<2x128xf32>, vector<128x512xf32>, vector<2x512xf32> -> vector<2x512xf32>
    %138 = arith.addf %136, %137 : vector<2x512xf32>
    %139 = arith.negf %138 : vector<2x512xf32>
    %140 = math.exp %139 : vector<2x512xf32>
    %cst_35 = arith.constant 1.000000e+00 : f32
    %141 = vector.broadcast %cst_35 : f32 to vector<2x512xf32>
    %142 = arith.addf %141, %140 : vector<2x512xf32>
    %143 = arith.divf %141, %142 : vector<2x512xf32>
    %144 = vector.extract_strided_slice %143 {offsets = [0, 0], sizes = [2, 128], strides = [1, 1]} : vector<2x512xf32> to vector<2x128xf32>
    %145 = vector.extract_strided_slice %143 {offsets = [0, 128], sizes = [2, 128], strides = [1, 1]} : vector<2x512xf32> to vector<2x128xf32>
    %146 = vector.extract_strided_slice %143 {offsets = [0, 384], sizes = [2, 128], strides = [1, 1]} : vector<2x512xf32> to vector<2x128xf32>
    %147 = vector.extract_strided_slice %138 {offsets = [0, 256], sizes = [2, 128], strides = [1, 1]} : vector<2x512xf32> to vector<2x128xf32>
    %148 = math.tanh %147 : vector<2x128xf32>
    %149 = arith.mulf %145, %133 : vector<2x128xf32>
    %150 = arith.mulf %144, %148 : vector<2x128xf32>
    %151 = arith.addf %149, %150 : vector<2x128xf32>
    %152 = math.tanh %151 : vector<2x128xf32>
    %153 = arith.mulf %146, %152 : vector<2x128xf32>
    %c0_36 = arith.constant 0 : index
    %c0_37 = arith.constant 0 : index
    %154 = vector.load %arg4[%c0_36, %c0_37] : memref<128x128xf32, #tpu.memory_space<vmem>>, vector<128x128xf32>
    %cst_38 = arith.constant dense<0.000000e+00> : vector<2x128xf32>
    %155 = tpu.matmul %153, %154, %cst_38 {dimension_numbers = #tpu.dot_dimension_numbers<[1], [0], [0], [1], [0, 0, 1, 1], [], []>} : vector<2x128xf32>, vector<128x128xf32>, vector<2x128xf32> -> vector<2x128xf32>
    %c0_39 = arith.constant 0 : index
    %c0_40 = arith.constant 0 : index
    %156 = vector.load %arg5[%c0_39, %c0_40] : memref<1x128xf32, #tpu.memory_space<vmem>>, vector<1x128xf32>
    %157 = vector.broadcast %156 : vector<1x128xf32> to vector<2x128xf32>
    %158 = arith.addf %155, %157 : vector<2x128xf32>
    %159 = arith.negf %158 : vector<2x128xf32>
    %160 = math.exp %159 : vector<2x128xf32>
    %cst_41 = arith.constant 1.000000e+00 : f32
    %161 = vector.broadcast %cst_41 : f32 to vector<2x128xf32>
    %162 = arith.addf %161, %160 : vector<2x128xf32>
    %163 = arith.divf %161, %162 : vector<2x128xf32>
    %c0_42 = arith.constant 0 : index
    %c0_43 = arith.constant 0 : index
    %164 = vector.load %arg6[%c0_42, %c0_43] : memref<2x128xf32, #tpu.memory_space<vmem>>, vector<2x128xf32>
    tpu.vector_store %arg6[%c0_42, %c0_43], %163 {strides = array<i32>} : memref<2x128xf32, #tpu.memory_space<vmem>>, vector<2x128xf32>,
    return
  }
}

</mosaic_0001>

<llo_original>
// kernel: tpu_custom_call.1
$region0: #{tpu_custom_call.1}
  #allocation0 [shape = 'u32[]', space=smem, size = 0x4, offset = 0x4, fixed_abs, tag = 'smem constant byte address 0x4 - core index']
  #allocation1 [shape = 'u32[72,128]{1,0:T(1,128)}', space=vmem, size = 0x9000, scoped, tag = 'internal scratch']
  #allocation2 [shape = 'f32[16,512]{1,0:T(8,128)}', space=vmem, size = 0x8000, scoped, tag = 'scratch operand']
  %s0 = inlined_call_operand.vmem [shape: f32[16,2], index: 0, kind: input, shape index: {}]
  %s1 = inlined_call_operand.vmem [shape: f32[2,512], index: 1, kind: input, shape index: {}]
  %s2 = inlined_call_operand.hbm [shape: f32[128,512], index: 2, kind: input, shape index: {}]
  %s3 = inlined_call_operand.vmem [shape: f32[1,512], index: 3, kind: input, shape index: {}]
  %s4 = inlined_call_operand.hbm [shape: f32[128,128], index: 4, kind: input, shape index: {}]
  %s5 = inlined_call_operand.vmem [shape: f32[1,128], index: 5, kind: input, shape index: {}]
  %s6 = inlined_call_operand.hbm [shape: f32[2,128], index: 6, kind: output, shape index: {}]
  %s7 = sld [smem:[#allocation0]]
  $region42: #{tpu_custom_call.1} parent=0
    _
  %s9 = ssub.s32 1, %s7
  %s10 = scalar_select 0, %s9, %s7
  $region1: #{tpu_custom_call.1} parent=0
    #allocation3 [shape = 'u8[262144]{0}', space=vmem, size = 0x40000, scoped, tag = 'input window, operand 2, single buffered']
    #allocation4 [shape = 's32[1]{0}', space=sflag, size = 0x4, scoped, tag = 'scoped memory for tpu_custom_call.1']
    #allocation5 [shape = 's32[1]{0}', space=sflag, size = 0x4, scoped, tag = 'scoped memory for tpu_custom_call.1']
    #allocation6 [shape = 'u8[65536]{0}', space=vmem, size = 0x10000, scoped, tag = 'input window, operand 4, single buffered']
    #allocation7 [shape = 's32[1]{0}', space=sflag, size = 0x4, scoped, tag = 'scoped memory for tpu_custom_call.1']
    #allocation8 [shape = 'u8[1024]{0}', space=vmem, size = 0x400, scoped, tag = 'output window, operand 0, single buffered']
    %11 = vsyncpa [#allocation4], 0
    %12 = vsyncpa [#allocation7], 0
    %13 = vsyncpa [#allocation5], 0
    // Predicated region
    $region2: #{tpu_custom_call.1} parent=1 // pred_check
      _
    $region3: #{tpu_custom_call.1} parent=1 // pred_check_branch
      %15 = sbr.rel (0) target = $region5
    $region4: #{tpu_custom_call.1} parent=1 // pred_region
      _
    $region5: #{tpu_custom_call.1} parent=1 // pred_fallthru
      _
    // Predicated region
    $region6: #{tpu_custom_call.1} parent=1 // pred_check
      _
    $region7: #{tpu_custom_call.1} parent=1 // pred_check_branch
      %17 = sbr.rel (0) target = $region9
    $region8: #{tpu_custom_call.1} parent=1 // pred_region
      _
    $region9: #{tpu_custom_call.1} parent=1 // pred_fallthru
      _
    // Predicated region
    $region10: #{tpu_custom_call.1} parent=1 // pred_check
      _
    $region11: #{tpu_custom_call.1} parent=1 // pred_check_branch
      %19 = sbr.rel (0) target = $region13
    $region12: #{tpu_custom_call.1} parent=1 // pred_region
      %21 = vsyncadd [#allocation4], 0
      %s22 = sshll.u32 %s2, 4
      %s23 = int_to_ptr.hbm [resolvable:$true] %s22
      %s24 = sshll.u32 [#allocation3], 4
      %s25 = int_to_ptr.vmem [resolvable:$true] %s24
      %30 = dma.hbm_to_vmem [thread:$0]  %s23, 8192, %s25, [#allocation4], 512, 512, 32
    $region13: #{tpu_custom_call.1} parent=1 // pred_fallthru
      _
    // Predicated region
    $region14: #{tpu_custom_call.1} parent=1 // pred_check
      _
    $region15: #{tpu_custom_call.1} parent=1 // pred_check_branch
      %32 = sbr.rel (0) target = $region17
    $region16: #{tpu_custom_call.1} parent=1 // pred_region
      _
    $region17: #{tpu_custom_call.1} parent=1 // pred_fallthru
      _
    // Predicated region
    $region18: #{tpu_custom_call.1} parent=1 // pred_check
      _
    $region19: #{tpu_custom_call.1} parent=1 // pred_check_branch
      %34 = sbr.rel (0) target = $region21
    $region20: #{tpu_custom_call.1} parent=1 // pred_region
      %36 = vsyncadd [#allocation7], 0
      %s37 = sshll.u32 %s4, 4
      %s38 = int_to_ptr.hbm [resolvable:$true] %s37
      %s39 = sshll.u32 [#allocation6], 4
      %s40 = int_to_ptr.vmem [resolvable:$true] %s39
      %45 = dma.hbm_to_vmem [thread:$0]  %s38, 2048, %s40, [#allocation7], 128, 128, 8
    $region21: #{tpu_custom_call.1} parent=1 // pred_fallthru
      _
    // Predicated region
    $region22: #{tpu_custom_call.1} parent=1 // pred_check
      _
    $region23: #{tpu_custom_call.1} parent=1 // pred_check_branch
      %47 = sbr.rel (0) target = $region25
    $region24: #{tpu_custom_call.1} parent=1 // pred_region
      _
    $region25: #{tpu_custom_call.1} parent=1 // pred_fallthru
      _
    // Predicated region
    $region26: #{tpu_custom_call.1} parent=1 // pred_check
      _
    $region27: #{tpu_custom_call.1} parent=1 // pred_check_branch
      %49 = sbr.rel (0) target = $region29
    $region28: #{tpu_custom_call.1} parent=1 // pred_region
      %51 = dma.done [#allocation4], 8192
    $region29: #{tpu_custom_call.1} parent=1 // pred_fallthru
      _
    // Predicated region
    $region30: #{tpu_custom_call.1} parent=1 // pred_check
      _
    $region31: #{tpu_custom_call.1} parent=1 // pred_check_branch
      %53 = sbr.rel (0) target = $region33
    $region32: #{tpu_custom_call.1} parent=1 // pred_region
      %55 = dma.done [#allocation7], 2048
    $region33: #{tpu_custom_call.1} parent=1 // pred_fallthru
      _
    %v56 = vld [vmem:[%s0] sm:$0xff]
    %v57 = vld [vmem:[%s0 + $0x8] sm:$0xff]
    %v58 = vld [vmem:[%s1] sm:$0xff]
    %v59 = vld [vmem:[%s3] sm:$0xf]
    %v61 = vperm.slane %v59, 0
    %v62 = vperm.slane %v59, 1
    %v63 = vperm.slane %v59, 2
    %v64 = vperm.slane %v59, 3
    %70 = vst [vmem:[#allocation1] ss:$4 sm:$0xff] %v58
    %v71 = vld.sshfl [vmem:[#allocation1] sm:$0xff pattern:$0x73625140]
    %v72 = vld.sshfl [vmem:[#allocation1 + $0x8] sm:$0xff pattern:$0x73625140]
    %v73 = vld.sshfl [vmem:[#allocation1 + $0x10] sm:$0xff pattern:$0x73625140]
    %v74 = vld.sshfl [vmem:[#allocation1 + $0x18] sm:$0xff pattern:$0x73625140]
    %vm75 = vcmask 15360
    %v77 = vsel %vm75, %v56, 0
    %v80 = vsel %vm75, %v57, 0
    %vm82 = vcmask 1041408
    %v83 = vsel %vm82, %v71, 0
    %v85 = vsel %vm82, %v72, 0
    %v87 = vsel %vm82, %v73, 0
    %v89 = vsel %vm82, %v74, 0
    %91 = vmatpush.msra.mxu0 0.0
    %92 = vmatpush.msra.mxu0 0.0
    %93 = vmatpush.msra.mxu0 0.0
    %94 = vmatpush.msra.mxu0 0.0
    %95 = vmatpush.msra.mxu0 0.0
    %96 = vmatpush.msra.mxu0 0.0
    %97 = vmatpush.msra.mxu0 0.0
    %98 = vmatpush.msra.mxu0 0.0
    %99 = vmatpush.msra.mxu0 0.0
    %100 = vmatpush.msra.mxu0 0.0
    %101 = vmatpush.msra.mxu0 0.0
    %102 = vmatpush.msra.mxu0 0.0
    %103 = vmatpush.msra.mxu0 0.0
    %104 = vmatpush.msra.mxu0 0.0
    %105 = vmatpush.msra.mxu0 0.0
    %106 = vmatpush.msra.mxu0 %v83
    %107 = vmatmul.f32.gmra.mxu0 %v77
    %v108 = vpop.f32.mrf.mxu0
    %v109 = vadd.f32 %v61, %v108
    %110 = vmatmul.f32.gmra.mxu0 %v80
    %v111 = vpop.f32.mrf.mxu0
    %v112 = vadd.f32 %v61, %v111
    %113 = vdwg.mxu0
    %114 = vmatpush.msra.mxu0 0.0
    %115 = vmatpush.msra.mxu0 0.0
    %116 = vmatpush.msra.mxu0 0.0
    %117 = vmatpush.msra.mxu0 0.0
    %118 = vmatpush.msra.mxu0 0.0
    %119 = vmatpush.msra.mxu0 0.0
    %120 = vmatpush.msra.mxu0 0.0
    %121 = vmatpush.msra.mxu0 0.0
    %122 = vmatpush.msra.mxu0 0.0
    %123 = vmatpush.msra.mxu0 0.0
    %124 = vmatpush.msra.mxu0 0.0
    %125 = vmatpush.msra.mxu0 0.0
    %126 = vmatpush.msra.mxu0 0.0
    %127 = vmatpush.msra.mxu0 0.0
    %128 = vmatpush.msra.mxu0 0.0
    %129 = vmatpush.msra.mxu0 %v85
    %130 = vmatmul.f32.gmra.mxu0 %v77
    %v131 = vpop.f32.mrf.mxu0
    %v132 = vadd.f32 %v62, %v131
    %133 = vmatmul.f32.gmra.mxu0 %v80
    %v134 = vpop.f32.mrf.mxu0
    %v135 = vadd.f32 %v62, %v134
    %136 = vdwg.mxu0
    %137 = vmatpush.msra.mxu0 0.0
    %138 = vmatpush.msra.mxu0 0.0
    %139 = vmatpush.msra.mxu0 0.0
    %140 = vmatpush.msra.mxu0 0.0
    %141 = vmatpush.msra.mxu0 0.0
    %142 = vmatpush.msra.mxu0 0.0
    %143 = vmatpush.msra.mxu0 0.0
    %144 = vmatpush.msra.mxu0 0.0
    %145 = vmatpush.msra.mxu0 0.0
    %146 = vmatpush.msra.mxu0 0.0
    %147 = vmatpush.msra.mxu0 0.0
    %148 = vmatpush.msra.mxu0 0.0
    %149 = vmatpush.msra.mxu0 0.0
    %150 = vmatpush.msra.mxu0 0.0
    %151 = vmatpush.msra.mxu0 0.0
    %152 = vmatpush.msra.mxu0 %v87
    %153 = vmatmul.f32.gmra.mxu0 %v77
    %v154 = vpop.f32.mrf.mxu0
    %v155 = vadd.f32 %v63, %v154
    %156 = vmatmul.f32.gmra.mxu0 %v80
    %v157 = vpop.f32.mrf.mxu0
    %v158 = vadd.f32 %v63, %v157
    %159 = vdwg.mxu0
    %160 = vmatpush.msra.mxu0 0.0
    %161 = vmatpush.msra.mxu0 0.0
    %162 = vmatpush.msra.mxu0 0.0
    %163 = vmatpush.msra.mxu0 0.0
    %164 = vmatpush.msra.mxu0 0.0
    %165 = vmatpush.msra.mxu0 0.0
    %166 = vmatpush.msra.mxu0 0.0
    %167 = vmatpush.msra.mxu0 0.0
    %168 = vmatpush.msra.mxu0 0.0
    %169 = vmatpush.msra.mxu0 0.0
    %170 = vmatpush.msra.mxu0 0.0
    %171 = vmatpush.msra.mxu0 0.0
    %172 = vmatpush.msra.mxu0 0.0
    %173 = vmatpush.msra.mxu0 0.0
    %174 = vmatpush.msra.mxu0 0.0
    %175 = vmatpush.msra.mxu0 %v89
    %176 = vmatmul.f32.gmra.mxu0 %v77
    %v177 = vpop.f32.mrf.mxu0
    %v178 = vadd.f32 %v64, %v177
    %179 = vmatmul.f32.gmra.mxu0 %v80
    %v180 = vpop.f32.mrf.mxu0
    %v181 = vadd.f32 %v64, %v180
    %182 = vdwg.mxu0
    %183 = vst [vmem:[#allocation2] sm:$0xff] %v109
    %184 = vst [vmem:[#allocation2 + $0x8] sm:$0xff] %v132
    %185 = vst [vmem:[#allocation2 + $0x10] sm:$0xff] %v155
    %186 = vst [vmem:[#allocation2 + $0x18] sm:$0xff] %v178
    %187 = vst [vmem:[#allocation2 + $0x20] sm:$0xff] %v112
    %188 = vst [vmem:[#allocation2 + $0x28] sm:$0xff] %v135
    %189 = vst [vmem:[#allocation2 + $0x30] sm:$0xff] %v158
    %190 = vst [vmem:[#allocation2 + $0x38] sm:$0xff] %v181
    %v191 = vld [vmem:[#allocation3] sm:$0xff]
    %v192 = vld [vmem:[#allocation3 + $0x8] sm:$0xff]
    %v193 = vld [vmem:[#allocation3 + $0x10] sm:$0xff]
    %v194 = vld [vmem:[#allocation3 + $0x18] sm:$0xff]
    %v195 = vld [vmem:[#allocation3 + $0x20] sm:$0xff]
    %v196 = vld [vmem:[#allocation3 + $0x28] sm:$0xff]
    %v197 = vld [vmem:[#allocation3 + $0x30] sm:$0xff]
    %v198 = vld [vmem:[#allocation3 + $0x38] sm:$0xff]
    %v199 = vld [vmem:[#allocation3 + $0x40] sm:$0xff]
    %v200 = vld [vmem:[#allocation3 + $0x48] sm:$0xff]
    %v201 = vld [vmem:[#allocation3 + $0x50] sm:$0xff]
    %v202 = vld [vmem:[#allocation3 + $0x58] sm:$0xff]
    %v203 = vld [vmem:[#allocation3 + $0x60] sm:$0xff]
    %v204 = vld [vmem:[#allocation3 + $0x68] sm:$0xff]
    %v205 = vld [vmem:[#allocation3 + $0x70] sm:$0xff]
    %v206 = vld [vmem:[#allocation3 + $0x78] sm:$0xff]
    %v207 = vld [vmem:[#allocation3 + $0x80] sm:$0xff]
    %v208 = vld [vmem:[#allocation3 + $0x88] sm:$0xff]
    %v209 = vld [vmem:[#allocation3 + $0x90] sm:$0xff]
    %v210 = vld [vmem:[#allocation3 + $0x98] sm:$0xff]
    %v211 = vld [vmem:[#allocation3 + $0xa0] sm:$0xff]
    %v212 = vld [vmem:[#allocation3 + $0xa8] sm:$0xff]
    %v213 = vld [vmem:[#allocation3 + $0xb0] sm:$0xff]
    %v214 = vld [vmem:[#allocation3 + $0xb8] sm:$0xff]
    %v215 = vld [vmem:[#allocation3 + $0xc0] sm:$0xff]
    %v216 = vld [vmem:[#allocation3 + $0xc8] sm:$0xff]
    %v217 = vld [vmem:[#allocation3 + $0xd0] sm:$0xff]
    %v218 = vld [vmem:[#allocation3 + $0xd8] sm:$0xff]
    %v219 = vld [vmem:[#allocation3 + $0xe0] sm:$0xff]
    %v220 = vld [vmem:[#allocation3 + $0xe8] sm:$0xff]
    %v221 = vld [vmem:[#allocation3 + $0xf0] sm:$0xff]
    %v222 = vld [vmem:[#allocation3 + $0xf8] sm:$0xff]
    %v223 = vld [vmem:[#allocation3 + $0x100] sm:$0xff]
    %v224 = vld [vmem:[#allocation3 + $0x108] sm:$0xff]
    %v225 = vld [vmem:[#allocation3 + $0x110] sm:$0xff]
    %v226 = vld [vmem:[#allocation3 + $0x118] sm:$0xff]
    %v227 = vld [vmem:[#allocation3 + $0x120] sm:$0xff]
    %v228 = vld [vmem:[#allocation3 + $0x128] sm:$0xff]
    %v229 = vld [vmem:[#allocation3 + $0x130] sm:$0xff]
    %v230 = vld [vmem:[#allocation3 + $0x138] sm:$0xff]
    %v231 = vld [vmem:[#allocation3 + $0x140] sm:$0xff]
    %v232 = vld [vmem:[#allocation3 + $0x148] sm:$0xff]
    %v233 = vld [vmem:[#allocation3 + $0x150] sm:$0xff]
    %v234 = vld [vmem:[#allocation3 + $0x158] sm:$0xff]
    %v235 = vld [vmem:[#allocation3 + $0x160] sm:$0xff]
    %v236 = vld [vmem:[#allocation3 + $0x168] sm:$0xff]
    %v237 = vld [vmem:[#allocation3 + $0x170] sm:$0xff]
    %v238 = vld [vmem:[#allocation3 + $0x178] sm:$0xff]
    %v239 = vld [vmem:[#allocation3 + $0x180] sm:$0xff]
    %v240 = vld [vmem:[#allocation3 + $0x188] sm:$0xff]
    %v241 = vld [vmem:[#allocation3 + $0x190] sm:$0xff]
    %v242 = vld [vmem:[#allocation3 + $0x198] sm:$0xff]
    %v243 = vld [vmem:[#allocation3 + $0x1a0] sm:$0xff]
    %v244 = vld [vmem:[#allocation3 + $0x1a8] sm:$0xff]
    %v245 = vld [vmem:[#allocation3 + $0x1b0] sm:$0xff]
    %v246 = vld [vmem:[#allocation3 + $0x1b8] sm:$0xff]
    %v247 = vld [vmem:[#allocation3 + $0x1c0] sm:$0xff]
    %v248 = vld [vmem:[#allocation3 + $0x1c8] sm:$0xff]
    %v249 = vld [vmem:[#allocation3 + $0x1d0] sm:$0xff]
    %v250 = vld [vmem:[#allocation3 + $0x1d8] sm:$0xff]
    %v251 = vld [vmem:[#allocation3 + $0x1e0] sm:$0xff]
    %v252 = vld [vmem:[#allocation3 + $0x1e8] sm:$0xff]
    %v253 = vld [vmem:[#allocation3 + $0x1f0] sm:$0xff]
    %v254 = vld [vmem:[#allocation3 + $0x1f8] sm:$0xff]
    %v255 = vld [vmem:[#allocation2] sm:$0x3]
    %v256 = vld [vmem:[#allocation2 + $0x8] sm:$0x3]
    %v257 = vld [vmem:[#allocation2 + $0x10] sm:$0x3]
    %v258 = vld [vmem:[#allocation2 + $0x18] sm:$0x3]
    %259 = vmatpush.msra.mxu0 %v251
    %260 = vmatpush.msra.mxu0 %v247
    %261 = vmatpush.msra.mxu0 %v243
    %262 = vmatpush.msra.mxu0 %v239
    %263 = vmatpush.msra.mxu0 %v235
    %264 = vmatpush.msra.mxu0 %v231
    %265 = vmatpush.msra.mxu0 %v227
    %266 = vmatpush.msra.mxu0 %v223
    %267 = vmatpush.msra.mxu0 %v219
    %268 = vmatpush.msra.mxu0 %v215
    %269 = vmatpush.msra.mxu0 %v211
    %270 = vmatpush.msra.mxu0 %v207
    %271 = vmatpush.msra.mxu0 %v203
    %272 = vmatpush.msra.mxu0 %v199
    %273 = vmatpush.msra.mxu0 %v195
    %274 = vmatpush.msra.mxu0 %v191
    %275 = vmatmul.f32.gmra.mxu0 0.0
    %v276 = vpop.f32.mrf.mxu0
    %v277 = vadd.f32 0.0, %v276
    %278 = vdwg.mxu0
    %279 = vmatpush.msra.mxu0 %v252
    %280 = vmatpush.msra.mxu0 %v248
    %281 = vmatpush.msra.mxu0 %v244
    %282 = vmatpush.msra.mxu0 %v240
    %283 = vmatpush.msra.mxu0 %v236
    %284 = vmatpush.msra.mxu0 %v232
    %285 = vmatpush.msra.mxu0 %v228
    %286 = vmatpush.msra.mxu0 %v224
    %287 = vmatpush.msra.mxu0 %v220
    %288 = vmatpush.msra.mxu0 %v216
    %289 = vmatpush.msra.mxu0 %v212
    %290 = vmatpush.msra.mxu0 %v208
    %291 = vmatpush.msra.mxu0 %v204
    %292 = vmatpush.msra.mxu0 %v200
    %293 = vmatpush.msra.mxu0 %v196
    %294 = vmatpush.msra.mxu0 %v192
    %295 = vmatmul.f32.gmra.mxu0 0.0
    %v296 = vpop.f32.mrf.mxu0
    %v297 = vadd.f32 0.0, %v296
    %298 = vdwg.mxu0
    %299 = vmatpush.msra.mxu0 %v253
    %300 = vmatpush.msra.mxu0 %v249
    %301 = vmatpush.msra.mxu0 %v245
    %302 = vmatpush.msra.mxu0 %v241
    %303 = vmatpush.msra.mxu0 %v237
    %304 = vmatpush.msra.mxu0 %v233
    %305 = vmatpush.msra.mxu0 %v229
    %306 = vmatpush.msra.mxu0 %v225
    %307 = vmatpush.msra.mxu0 %v221
    %308 = vmatpush.msra.mxu0 %v217
    %309 = vmatpush.msra.mxu0 %v213
    %310 = vmatpush.msra.mxu0 %v209
    %311 = vmatpush.msra.mxu0 %v205
    %312 = vmatpush.msra.mxu0 %v201
    %313 = vmatpush.msra.mxu0 %v197
    %314 = vmatpush.msra.mxu0 %v193
    %315 = vmatmul.f32.gmra.mxu0 0.0
    %v316 = vpop.f32.mrf.mxu0
    %v317 = vadd.f32 0.0, %v316
    %318 = vdwg.mxu0
    %319 = vmatpush.msra.mxu0 %v254
    %320 = vmatpush.msra.mxu0 %v250
    %321 = vmatpush.msra.mxu0 %v246
    %322 = vmatpush.msra.mxu0 %v242
    %323 = vmatpush.msra.mxu0 %v238
    %324 = vmatpush.msra.mxu0 %v234
    %325 = vmatpush.msra.mxu0 %v230
    %326 = vmatpush.msra.mxu0 %v226
    %327 = vmatpush.msra.mxu0 %v222
    %328 = vmatpush.msra.mxu0 %v218
    %329 = vmatpush.msra.mxu0 %v214
    %330 = vmatpush.msra.mxu0 %v210
    %331 = vmatpush.msra.mxu0 %v206
    %332 = vmatpush.msra.mxu0 %v202
    %333 = vmatpush.msra.mxu0 %v198
    %334 = vmatpush.msra.mxu0 %v194
    %335 = vmatmul.f32.gmra.mxu0 0.0
    %v336 = vpop.f32.mrf.mxu0
    %v337 = vadd.f32 0.0, %v336
    %338 = vdwg.mxu0
    %v339 = vadd.f32 %v255, %v277
    %v340 = vadd.f32 %v256, %v297
    %v341 = vadd.f32 %v257, %v317
    %v342 = vadd.f32 %v258, %v337
    %v343 = vxor.u32 %v339, 2147483648
    %v344 = vxor.u32 %v340, 2147483648
    %v345 = vxor.u32 %v342, 2147483648
    %v346 = vmul.f32 %v343, 1.442695
    %v347 = vpow.pop %v346
    %v348 = vmul.f32 %v344, 1.442695
    %v349 = vpow.pop %v348
    %v350 = vmul.f32 %v345, 1.442695
    %v351 = vpow.pop %v350
    %v352 = vadd.f32 %v347, 1.0
    %v353 = vadd.f32 %v349, 1.0
    %v354 = vadd.f32 %v351, 1.0
    %v355 = vrcp.pop %v352
    %v356 = vmul.f32 %v352, %v355
    %v357 = vsub.f32 1.0, %v356
    %v358 = vmul.f32 %v355, %v357
    %v359 = vadd.f32 %v355, %v358
    %vm360 = vweird.f32 %v352
    %vm361 = vweird.f32 %v355
    %vm362 = vmor %vm360, %vm361
    %v363 = vsel %vm362, %v355, %v359
    %v364 = vand.u32 2147483647, %v352
    %vm365 = vcmp.eq.f32.partialorder %v364, 8.507059e+37
    %v366 = vand.u32 %v352, 2147483648
    %v367 = vor.u32 1.1754944e-38, %v366
    %v368 = vsel %vm365, %v367, %v363
    %v369 = vmul.f32 1.0, %v368
    %v370 = vrcp.pop %v353
    %v371 = vmul.f32 %v353, %v370
    %v372 = vsub.f32 1.0, %v371
    %v373 = vmul.f32 %v370, %v372
    %v374 = vadd.f32 %v370, %v373
    %vm375 = vweird.f32 %v353
    %vm376 = vweird.f32 %v370
    %vm377 = vmor %vm375, %vm376
    %v378 = vsel %vm377, %v370, %v374
    %v379 = vand.u32 2147483647, %v353
    %vm380 = vcmp.eq.f32.partialorder %v379, 8.507059e+37
    %v381 = vand.u32 %v353, 2147483648
    %v382 = vor.u32 1.1754944e-38, %v381
    %v383 = vsel %vm380, %v382, %v378
    %v384 = vmul.f32 1.0, %v383
    %v385 = vrcp.pop %v354
    %v386 = vmul.f32 %v354, %v385
    %v387 = vsub.f32 1.0, %v386
    %v388 = vmul.f32 %v385, %v387
    %v389 = vadd.f32 %v385, %v388
    %vm390 = vweird.f32 %v354
    %vm391 = vweird.f32 %v385
    %vm392 = vmor %vm390, %vm391
    %v393 = vsel %vm392, %v385, %v389
    %v394 = vand.u32 2147483647, %v354
    %vm395 = vcmp.eq.f32.partialorder %v394, 8.507059e+37
    %v396 = vand.u32 %v354, 2147483648
    %v397 = vor.u32 1.1754944e-38, %v396
    %v398 = vsel %vm395, %v397, %v393
    %v399 = vmul.f32 1.0, %v398
    %v400 = vtanh.pop %v341
    %v401 = vmul.f32 %v384, 0.0
    %v402 = vmul.f32 %v369, %v400
    %v403 = vadd.f32 %v401, %v402
    %v404 = vtanh.pop %v403
    %v405 = vmul.f32 %v399, %v404
    %v406 = vld [vmem:[#allocation2] sm:$0xc]
    %v407 = vld [vmem:[#allocation2 + $0x8] sm:$0xc]
    %v408 = vld [vmem:[#allocation2 + $0x10] sm:$0xc]
    %v409 = vld [vmem:[#allocation2 + $0x18] sm:$0xc]
    %410 = vmatpush.msra.mxu0 %v251
    %411 = vmatpush.msra.mxu0 %v247
    %412 = vmatpush.msra.mxu0 %v243
    %413 = vmatpush.msra.mxu0 %v239
    %414 = vmatpush.msra.mxu0 %v235
    %415 = vmatpush.msra.mxu0 %v231
    %416 = vmatpush.msra.mxu0 %v227
    %417 = vmatpush.msra.mxu0 %v223
    %418 = vmatpush.msra.mxu0 %v219
    %419 = vmatpush.msra.mxu0 %v215
    %420 = vmatpush.msra.mxu0 %v211
    %421 = vmatpush.msra.mxu0 %v207
    %422 = vmatpush.msra.mxu0 %v203
    %423 = vmatpush.msra.mxu0 %v199
    %424 = vmatpush.msra.mxu0 %v195
    %425 = vmatpush.msra.mxu0 %v191
    %426 = vmatmul.f32.gmra.mxu0 %v405
    %v427 = vpop.f32.mrf.mxu0
    %v428 = vadd.f32 0.0, %v427
    %429 = vdwg.mxu0
    %430 = vmatpush.msra.mxu0 %v252
    %431 = vmatpush.msra.mxu0 %v248
    %432 = vmatpush.msra.mxu0 %v244
    %433 = vmatpush.msra.mxu0 %v240
    %434 = vmatpush.msra.mxu0 %v236
    %435 = vmatpush.msra.mxu0 %v232
    %436 = vmatpush.msra.mxu0 %v228
    %437 = vmatpush.msra.mxu0 %v224
    %438 = vmatpush.msra.mxu0 %v220
    %439 = vmatpush.msra.mxu0 %v216
    %440 = vmatpush.msra.mxu0 %v212
    %441 = vmatpush.msra.mxu0 %v208
    %442 = vmatpush.msra.mxu0 %v204
    %443 = vmatpush.msra.mxu0 %v200
    %444 = vmatpush.msra.mxu0 %v196
    %445 = vmatpush.msra.mxu0 %v192
    %446 = vmatmul.f32.gmra.mxu0 %v405
    %v447 = vpop.f32.mrf.mxu0
    %v448 = vadd.f32 0.0, %v447
    %449 = vdwg.mxu0
    %450 = vmatpush.msra.mxu0 %v253
    %451 = vmatpush.msra.mxu0 %v249
    %452 = vmatpush.msra.mxu0 %v245
    %453 = vmatpush.msra.mxu0 %v241
    %454 = vmatpush.msra.mxu0 %v237
    %455 = vmatpush.msra.mxu0 %v233
    %456 = vmatpush.msra.mxu0 %v229
    %457 = vmatpush.msra.mxu0 %v225
    %458 = vmatpush.msra.mxu0 %v221
    %459 = vmatpush.msra.mxu0 %v217
    %460 = vmatpush.msra.mxu0 %v213
    %461 = vmatpush.msra.mxu0 %v209
    %462 = vmatpush.msra.mxu0 %v205
    %463 = vmatpush.msra.mxu0 %v201
    %464 = vmatpush.msra.mxu0 %v197
    %465 = vmatpush.msra.mxu0 %v193
    %466 = vmatmul.f32.gmra.mxu0 %v405
    %v467 = vpop.f32.mrf.mxu0
    %v468 = vadd.f32 0.0, %v467
    %469 = vdwg.mxu0
    %470 = vmatpush.msra.mxu0 %v254
    %471 = vmatpush.msra.mxu0 %v250
    %472 = vmatpush.msra.mxu0 %v246
    %473 = vmatpush.msra.mxu0 %v242
    %474 = vmatpush.msra.mxu0 %v238
    %475 = vmatpush.msra.mxu0 %v234
    %476 = vmatpush.msra.mxu0 %v230
    %477 = vmatpush.msra.mxu0 %v226
    %478 = vmatpush.msra.mxu0 %v222
    %479 = vmatpush.msra.mxu0 %v218
    %480 = vmatpush.msra.mxu0 %v214
    %481 = vmatpush.msra.mxu0 %v210
    %482 = vmatpush.msra.mxu0 %v206
    %483 = vmatpush.msra.mxu0 %v202
    %484 = vmatpush.msra.mxu0 %v198
    %485 = vmatpush.msra.mxu0 %v194
    %486 = vmatmul.f32.gmra.mxu0 %v405
    %v487 = vpop.f32.mrf.mxu0
    %v488 = vadd.f32 0.0, %v487
    %489 = vdwg.mxu0
    %v494 = vrot.slane %v428, 6
    %v495 = vrot.slane %v448, 6
    %v496 = vrot.slane %v468, 6
    %v497 = vrot.slane %v488, 6
    %v502 = vadd.f32 %v406, %v494
    %v503 = vadd.f32 %v407, %v495
    %v504 = vadd.f32 %v408, %v496
    %v505 = vadd.f32 %v409, %v497
    %v506 = vxor.u32 %v502, 2147483648
    %v507 = vxor.u32 %v503, 2147483648
    %v508 = vxor.u32 %v505, 2147483648
    %v509 = vmul.f32 %v506, 1.442695
    %v510 = vpow.pop %v509
    %v511 = vmul.f32 %v507, 1.442695
    %v512 = vpow.pop %v511
    %v513 = vmul.f32 %v508, 1.442695
    %v514 = vpow.pop %v513
    %v515 = vadd.f32 %v510, 1.0
    %v516 = vadd.f32 %v512, 1.0
    %v517 = vadd.f32 %v514, 1.0
    %v518 = vrcp.pop %v515
    %v519 = vmul.f32 %v515, %v518
    %v520 = vsub.f32 1.0, %v519
    %v521 = vmul.f32 %v518, %v520
    %v522 = vadd.f32 %v518, %v521
    %vm523 = vweird.f32 %v515
    %vm524 = vweird.f32 %v518
    %vm525 = vmor %vm523, %vm524
    %v526 = vsel %vm525, %v518, %v522
    %v527 = vand.u32 2147483647, %v515
    %vm528 = vcmp.eq.f32.partialorder %v527, 8.507059e+37
    %v529 = vand.u32 %v515, 2147483648
    %v530 = vor.u32 1.1754944e-38, %v529
    %v531 = vsel %vm528, %v530, %v526
    %v532 = vmul.f32 1.0, %v531
    %v533 = vrcp.pop %v516
    %v534 = vmul.f32 %v516, %v533
    %v535 = vsub.f32 1.0, %v534
    %v536 = vmul.f32 %v533, %v535
    %v537 = vadd.f32 %v533, %v536
    %vm538 = vweird.f32 %v516
    %vm539 = vweird.f32 %v533
    %vm540 = vmor %vm538, %vm539
    %v541 = vsel %vm540, %v533, %v537
    %v542 = vand.u32 2147483647, %v516
    %vm543 = vcmp.eq.f32.partialorder %v542, 8.507059e+37
    %v544 = vand.u32 %v516, 2147483648
    %v545 = vor.u32 1.1754944e-38, %v544
    %v546 = vsel %vm543, %v545, %v541
    %v547 = vmul.f32 1.0, %v546
    %v548 = vrcp.pop %v517
    %v549 = vmul.f32 %v517, %v548
    %v550 = vsub.f32 1.0, %v549
    %v551 = vmul.f32 %v548, %v550
    %v552 = vadd.f32 %v548, %v551
    %vm553 = vweird.f32 %v517
    %vm554 = vweird.f32 %v548
    %vm555 = vmor %vm553, %vm554
    %v556 = vsel %vm555, %v548, %v552
    %v557 = vand.u32 2147483647, %v517
    %vm558 = vcmp.eq.f32.partialorder %v557, 8.507059e+37
    %v559 = vand.u32 %v517, 2147483648
    %v560 = vor.u32 1.1754944e-38, %v559
    %v561 = vsel %vm558, %v560, %v556
    %v562 = vmul.f32 1.0, %v561
    %v563 = vtanh.pop %v504
    %v565 = vrot.slane %v403, 6
    %v567 = vmul.f32 %v547, %v565
    %v568 = vmul.f32 %v532, %v563
    %v569 = vadd.f32 %v567, %v568
    %v570 = vtanh.pop %v569
    %v571 = vmul.f32 %v562, %v570
    %v572 = vld [vmem:[#allocation2] sm:$0x30]
    %v573 = vld [vmem:[#allocation2 + $0x8] sm:$0x30]
    %v574 = vld [vmem:[#allocation2 + $0x10] sm:$0x30]
    %v575 = vld [vmem:[#allocation2 + $0x18] sm:$0x30]
    %v577 = vrot.slane %v571, 2
    %579 = vmatpush.msra.mxu0 %v251
    %580 = vmatpush.msra.mxu0 %v247
    %581 = vmatpush.msra.mxu0 %v243
    %582 = vmatpush.msra.mxu0 %v239
    %583 = vmatpush.msra.mxu0 %v235
    %584 = vmatpush.msra.mxu0 %v231
    %585 = vmatpush.msra.mxu0 %v227
    %586 = vmatpush.msra.mxu0 %v223
    %587 = vmatpush.msra.mxu0 %v219
    %588 = vmatpush.msra.mxu0 %v215
    %589 = vmatpush.msra.mxu0 %v211
    %590 = vmatpush.msra.mxu0 %v207
    %591 = vmatpush.msra.mxu0 %v203
    %592 = vmatpush.msra.mxu0 %v199
    %593 = vmatpush.msra.mxu0 %v195
    %594 = vmatpush.msra.mxu0 %v191
    %595 = vmatmul.f32.gmra.mxu0 %v577
    %v596 = vpop.f32.mrf.mxu0
    %v597 = vadd.f32 0.0, %v596
    %598 = vdwg.mxu0
    %599 = vmatpush.msra.mxu0 %v252
    %600 = vmatpush.msra.mxu0 %v248
    %601 = vmatpush.msra.mxu0 %v244
    %602 = vmatpush.msra.mxu0 %v240
    %603 = vmatpush.msra.mxu0 %v236
    %604 = vmatpush.msra.mxu0 %v232
    %605 = vmatpush.msra.mxu0 %v228
    %606 = vmatpush.msra.mxu0 %v224
    %607 = vmatpush.msra.mxu0 %v220
    %608 = vmatpush.msra.mxu0 %v216
    %609 = vmatpush.msra.mxu0 %v212
    %610 = vmatpush.msra.mxu0 %v208
    %611 = vmatpush.msra.mxu0 %v204
    %612 = vmatpush.msra.mxu0 %v200
    %613 = vmatpush.msra.mxu0 %v196
    %614 = vmatpush.msra.mxu0 %v192
    %615 = vmatmul.f32.gmra.mxu0 %v577
    %v616 = vpop.f32.mrf.mxu0
    %v617 = vadd.f32 0.0, %v616
    %618 = vdwg.mxu0
    %619 = vmatpush.msra.mxu0 %v253
    %620 = vmatpush.msra.mxu0 %v249
    %621 = vmatpush.msra.mxu0 %v245
    %622 = vmatpush.msra.mxu0 %v241
    %623 = vmatpush.msra.mxu0 %v237
    %624 = vmatpush.msra.mxu0 %v233
    %625 = vmatpush.msra.mxu0 %v229
    %626 = vmatpush.msra.mxu0 %v225
    %627 = vmatpush.msra.mxu0 %v221
    %628 = vmatpush.msra.mxu0 %v217
    %629 = vmatpush.msra.mxu0 %v213
    %630 = vmatpush.msra.mxu0 %v209
    %631 = vmatpush.msra.mxu0 %v205
    %632 = vmatpush.msra.mxu0 %v201
    %633 = vmatpush.msra.mxu0 %v197
    %634 = vmatpush.msra.mxu0 %v193
    %635 = vmatmul.f32.gmra.mxu0 %v577
    %v636 = vpop.f32.mrf.mxu0
    %v637 = vadd.f32 0.0, %v636
    %638 = vdwg.mxu0
    %639 = vmatpush.msra.mxu0 %v254
    %640 = vmatpush.msra.mxu0 %v250
    %641 = vmatpush.msra.mxu0 %v246
    %642 = vmatpush.msra.mxu0 %v242
    %643 = vmatpush.msra.mxu0 %v238
    %644 = vmatpush.msra.mxu0 %v234
    %645 = vmatpush.msra.mxu0 %v230
    %646 = vmatpush.msra.mxu0 %v226
    %647 = vmatpush.msra.mxu0 %v222
    %648 = vmatpush.msra.mxu0 %v218
    %649 = vmatpush.msra.mxu0 %v214
    %650 = vmatpush.msra.mxu0 %v210
    %651 = vmatpush.msra.mxu0 %v206
    %652 = vmatpush.msra.mxu0 %v202
    %653 = vmatpush.msra.mxu0 %v198
    %654 = vmatpush.msra.mxu0 %v194
    %655 = vmatmul.f32.gmra.mxu0 %v577
    %v656 = vpop.f32.mrf.mxu0
    %v657 = vadd.f32 0.0, %v656
    %658 = vdwg.mxu0
    %v663 = vrot.slane %v597, 4
    %v664 = vrot.slane %v617, 4
    %v665 = vrot.slane %v637, 4
    %v666 = vrot.slane %v657, 4
    %v671 = vadd.f32 %v572, %v663
    %v672 = vadd.f32 %v573, %v664
    %v673 = vadd.f32 %v574, %v665
    %v674 = vadd.f32 %v575, %v666
    %v675 = vxor.u32 %v671, 2147483648
    %v676 = vxor.u32 %v672, 2147483648
    %v677 = vxor.u32 %v674, 2147483648
    %v678 = vmul.f32 %v675, 1.442695
    %v679 = vpow.pop %v678
    %v680 = vmul.f32 %v676, 1.442695
    %v681 = vpow.pop %v680
    %v682 = vmul.f32 %v677, 1.442695
    %v683 = vpow.pop %v682
    %v684 = vadd.f32 %v679, 1.0
    %v685 = vadd.f32 %v681, 1.0
    %v686 = vadd.f32 %v683, 1.0
    %v687 = vrcp.pop %v684
    %v688 = vmul.f32 %v684, %v687
    %v689 = vsub.f32 1.0, %v688
    %v690 = vmul.f32 %v687, %v689
    %v691 = vadd.f32 %v687, %v690
    %vm692 = vweird.f32 %v684
    %vm693 = vweird.f32 %v687
    %vm694 = vmor %vm692, %vm693
    %v695 = vsel %vm694, %v687, %v691
    %v696 = vand.u32 2147483647, %v684
    %vm697 = vcmp.eq.f32.partialorder %v696, 8.507059e+37
    %v698 = vand.u32 %v684, 2147483648
    %v699 = vor.u32 1.1754944e-38, %v698
    %v700 = vsel %vm697, %v699, %v695
    %v701 = vmul.f32 1.0, %v700
    %v702 = vrcp.pop %v685
    %v703 = vmul.f32 %v685, %v702
    %v704 = vsub.f32 1.0, %v703
    %v705 = vmul.f32 %v702, %v704
    %v706 = vadd.f32 %v702, %v705
    %vm707 = vweird.f32 %v685
    %vm708 = vweird.f32 %v702
    %vm709 = vmor %vm707, %vm708
    %v710 = vsel %vm709, %v702, %v706
    %v711 = vand.u32 2147483647, %v685
    %vm712 = vcmp.eq.f32.partialorder %v711, 8.507059e+37
    %v713 = vand.u32 %v685, 2147483648
    %v714 = vor.u32 1.1754944e-38, %v713
    %v715 = vsel %vm712, %v714, %v710
    %v716 = vmul.f32 1.0, %v715
    %v717 = vrcp.pop %v686
    %v718 = vmul.f32 %v686, %v717
    %v719 = vsub.f32 1.0, %v718
    %v720 = vmul.f32 %v717, %v719
    %v721 = vadd.f32 %v717, %v720
    %vm722 = vweird.f32 %v686
    %vm723 = vweird.f32 %v717
    %vm724 = vmor %vm722, %vm723
    %v725 = vsel %vm724, %v717, %v721
    %v726 = vand.u32 2147483647, %v686
    %vm727 = vcmp.eq.f32.partialorder %v726, 8.507059e+37
    %v728 = vand.u32 %v686, 2147483648
    %v729 = vor.u32 1.1754944e-38, %v728
    %v730 = vsel %vm727, %v729, %v725
    %v731 = vmul.f32 1.0, %v730
    %v732 = vtanh.pop %v673
    %v734 = vrot.slane %v569, 6
    %v736 = vmul.f32 %v716, %v734
    %v737 = vmul.f32 %v701, %v732
    %v738 = vadd.f32 %v736, %v737
    %v739 = vtanh.pop %v738
    %v740 = vmul.f32 %v731, %v739
    %v741 = vld [vmem:[#allocation2] sm:$0xc0]
    %v742 = vld [vmem:[#allocation2 + $0x8] sm:$0xc0]
    %v743 = vld [vmem:[#allocation2 + $0x10] sm:$0xc0]
    %v744 = vld [vmem:[#allocation2 + $0x18] sm:$0xc0]
    %v746 = vrot.slane %v740, 4
    %748 = vmatpush.msra.mxu0 %v251
    %749 = vmatpush.msra.mxu0 %v247
    %750 = vmatpush.msra.mxu0 %v243
    %751 = vmatpush.msra.mxu0 %v239
    %752 = vmatpush.msra.mxu0 %v235
    %753 = vmatpush.msra.mxu0 %v231
    %754 = vmatpush.msra.mxu0 %v227
    %755 = vmatpush.msra.mxu0 %v223
    %756 = vmatpush.msra.mxu0 %v219
    %757 = vmatpush.msra.mxu0 %v215
    %758 = vmatpush.msra.mxu0 %v211
    %759 = vmatpush.msra.mxu0 %v207
    %760 = vmatpush.msra.mxu0 %v203
    %761 = vmatpush.msra.mxu0 %v199
    %762 = vmatpush.msra.mxu0 %v195
    %763 = vmatpush.msra.mxu0 %v191
    %764 = vmatmul.f32.gmra.mxu0 %v746
    %v765 = vpop.f32.mrf.mxu0
    %v766 = vadd.f32 0.0, %v765
    %767 = vdwg.mxu0
    %768 = vmatpush.msra.mxu0 %v252
    %769 = vmatpush.msra.mxu0 %v248
    %770 = vmatpush.msra.mxu0 %v244
    %771 = vmatpush.msra.mxu0 %v240
    %772 = vmatpush.msra.mxu0 %v236
    %773 = vmatpush.msra.mxu0 %v232
    %774 = vmatpush.msra.mxu0 %v228
    %775 = vmatpush.msra.mxu0 %v224
    %776 = vmatpush.msra.mxu0 %v220
    %777 = vmatpush.msra.mxu0 %v216
    %778 = vmatpush.msra.mxu0 %v212
    %779 = vmatpush.msra.mxu0 %v208
    %780 = vmatpush.msra.mxu0 %v204
    %781 = vmatpush.msra.mxu0 %v200
    %782 = vmatpush.msra.mxu0 %v196
    %783 = vmatpush.msra.mxu0 %v192
    %784 = vmatmul.f32.gmra.mxu0 %v746
    %v785 = vpop.f32.mrf.mxu0
    %v786 = vadd.f32 0.0, %v785
    %787 = vdwg.mxu0
    %788 = vmatpush.msra.mxu0 %v253
    %789 = vmatpush.msra.mxu0 %v249
    %790 = vmatpush.msra.mxu0 %v245
    %791 = vmatpush.msra.mxu0 %v241
    %792 = vmatpush.msra.mxu0 %v237
    %793 = vmatpush.msra.mxu0 %v233
    %794 = vmatpush.msra.mxu0 %v229
    %795 = vmatpush.msra.mxu0 %v225
    %796 = vmatpush.msra.mxu0 %v221
    %797 = vmatpush.msra.mxu0 %v217
    %798 = vmatpush.msra.mxu0 %v213
    %799 = vmatpush.msra.mxu0 %v209
    %800 = vmatpush.msra.mxu0 %v205
    %801 = vmatpush.msra.mxu0 %v201
    %802 = vmatpush.msra.mxu0 %v197
    %803 = vmatpush.msra.mxu0 %v193
    %804 = vmatmul.f32.gmra.mxu0 %v746
    %v805 = vpop.f32.mrf.mxu0
    %v806 = vadd.f32 0.0, %v805
    %807 = vdwg.mxu0
    %808 = vmatpush.msra.mxu0 %v254
    %809 = vmatpush.msra.mxu0 %v250
    %810 = vmatpush.msra.mxu0 %v246
    %811 = vmatpush.msra.mxu0 %v242
    %812 = vmatpush.msra.mxu0 %v238
    %813 = vmatpush.msra.mxu0 %v234
    %814 = vmatpush.msra.mxu0 %v230
    %815 = vmatpush.msra.mxu0 %v226
    %816 = vmatpush.msra.mxu0 %v222
    %817 = vmatpush.msra.mxu0 %v218
    %818 = vmatpush.msra.mxu0 %v214
    %819 = vmatpush.msra.mxu0 %v210
    %820 = vmatpush.msra.mxu0 %v206
    %821 = vmatpush.msra.mxu0 %v202
    %822 = vmatpush.msra.mxu0 %v198
    %823 = vmatpush.msra.mxu0 %v194
    %824 = vmatmul.f32.gmra.mxu0 %v746
    %v825 = vpop.f32.mrf.mxu0
    %v826 = vadd.f32 0.0, %v825
    %827 = vdwg.mxu0
    %v832 = vrot.slane %v766, 2
    %v833 = vrot.slane %v786, 2
    %v834 = vrot.slane %v806, 2
    %v835 = vrot.slane %v826, 2
    %v840 = vadd.f32 %v741, %v832
    %v841 = vadd.f32 %v742, %v833
    %v842 = vadd.f32 %v743, %v834
    %v843 = vadd.f32 %v744, %v835
    %v844 = vxor.u32 %v840, 2147483648
    %v845 = vxor.u32 %v841, 2147483648
    %v846 = vxor.u32 %v843, 2147483648
    %v847 = vmul.f32 %v844, 1.442695
    %v848 = vpow.pop %v847
    %v849 = vmul.f32 %v845, 1.442695
    %v850 = vpow.pop %v849
    %v851 = vmul.f32 %v846, 1.442695
    %v852 = vpow.pop %v851
    %v853 = vadd.f32 %v848, 1.0
    %v854 = vadd.f32 %v850, 1.0
    %v855 = vadd.f32 %v852, 1.0
    %v856 = vrcp.pop %v853
    %v857 = vmul.f32 %v853, %v856
    %v858 = vsub.f32 1.0, %v857
    %v859 = vmul.f32 %v856, %v858
    %v860 = vadd.f32 %v856, %v859
    %vm861 = vweird.f32 %v853
    %vm862 = vweird.f32 %v856
    %vm863 = vmor %vm861, %vm862
    %v864 = vsel %vm863, %v856, %v860
    %v865 = vand.u32 2147483647, %v853
    %vm866 = vcmp.eq.f32.partialorder %v865, 8.507059e+37
    %v867 = vand.u32 %v853, 2147483648
    %v868 = vor.u32 1.1754944e-38, %v867
    %v869 = vsel %vm866, %v868, %v864
    %v870 = vmul.f32 1.0, %v869
    %v871 = vrcp.pop %v854
    %v872 = vmul.f32 %v854, %v871
    %v873 = vsub.f32 1.0, %v872
    %v874 = vmul.f32 %v871, %v873
    %v875 = vadd.f32 %v871, %v874
    %vm876 = vweird.f32 %v854
    %vm877 = vweird.f32 %v871
    %vm878 = vmor %vm876, %vm877
    %v879 = vsel %vm878, %v871, %v875
    %v880 = vand.u32 2147483647, %v854
    %vm881 = vcmp.eq.f32.partialorder %v880, 8.507059e+37
    %v882 = vand.u32 %v854, 2147483648
    %v883 = vor.u32 1.1754944e-38, %v882
    %v884 = vsel %vm881, %v883, %v879
    %v885 = vmul.f32 1.0, %v884
    %v886 = vrcp.pop %v855
    %v887 = vmul.f32 %v855, %v886
    %v888 = vsub.f32 1.0, %v887
    %v889 = vmul.f32 %v886, %v888
    %v890 = vadd.f32 %v886, %v889
    %vm891 = vweird.f32 %v855
    %vm892 = vweird.f32 %v886
    %vm893 = vmor %vm891, %vm892
    %v894 = vsel %vm893, %v886, %v890
    %v895 = vand.u32 2147483647, %v855
    %vm896 = vcmp.eq.f32.partialorder %v895, 8.507059e+37
    %v897 = vand.u32 %v855, 2147483648
    %v898 = vor.u32 1.1754944e-38, %v897
    %v899 = vsel %vm896, %v898, %v894
    %v900 = vmul.f32 1.0, %v899
    %v901 = vtanh.pop %v842
    %v903 = vrot.slane %v738, 6
    %v905 = vmul.f32 %v885, %v903
    %v906 = vmul.f32 %v870, %v901
    %v907 = vadd.f32 %v905, %v906
    %v908 = vtanh.pop %v907
    %v909 = vmul.f32 %v900, %v908
    %v910 = vld [vmem:[#allocation2 + $0x20] sm:$0x3]
    %v911 = vld [vmem:[#allocation2 + $0x28] sm:$0x3]
    %v912 = vld [vmem:[#allocation2 + $0x30] sm:$0x3]
    %v913 = vld [vmem:[#allocation2 + $0x38] sm:$0x3]
    %v915 = vrot.slane %v909, 6
    %917 = vmatpush.msra.mxu0 %v251
    %918 = vmatpush.msra.mxu0 %v247
    %919 = vmatpush.msra.mxu0 %v243
    %920 = vmatpush.msra.mxu0 %v239
    %921 = vmatpush.msra.mxu0 %v235
    %922 = vmatpush.msra.mxu0 %v231
    %923 = vmatpush.msra.mxu0 %v227
    %924 = vmatpush.msra.mxu0 %v223
    %925 = vmatpush.msra.mxu0 %v219
    %926 = vmatpush.msra.mxu0 %v215
    %927 = vmatpush.msra.mxu0 %v211
    %928 = vmatpush.msra.mxu0 %v207
    %929 = vmatpush.msra.mxu0 %v203
    %930 = vmatpush.msra.mxu0 %v199
    %931 = vmatpush.msra.mxu0 %v195
    %932 = vmatpush.msra.mxu0 %v191
    %933 = vmatmul.f32.gmra.mxu0 %v915
    %v934 = vpop.f32.mrf.mxu0
    %v935 = vadd.f32 0.0, %v934
    %936 = vdwg.mxu0
    %937 = vmatpush.msra.mxu0 %v252
    %938 = vmatpush.msra.mxu0 %v248
    %939 = vmatpush.msra.mxu0 %v244
    %940 = vmatpush.msra.mxu0 %v240
    %941 = vmatpush.msra.mxu0 %v236
    %942 = vmatpush.msra.mxu0 %v232
    %943 = vmatpush.msra.mxu0 %v228
    %944 = vmatpush.msra.mxu0 %v224
    %945 = vmatpush.msra.mxu0 %v220
    %946 = vmatpush.msra.mxu0 %v216
    %947 = vmatpush.msra.mxu0 %v212
    %948 = vmatpush.msra.mxu0 %v208
    %949 = vmatpush.msra.mxu0 %v204
    %950 = vmatpush.msra.mxu0 %v200
    %951 = vmatpush.msra.mxu0 %v196
    %952 = vmatpush.msra.mxu0 %v192
    %953 = vmatmul.f32.gmra.mxu0 %v915
    %v954 = vpop.f32.mrf.mxu0
    %v955 = vadd.f32 0.0, %v954
    %956 = vdwg.mxu0
    %957 = vmatpush.msra.mxu0 %v253
    %958 = vmatpush.msra.mxu0 %v249
    %959 = vmatpush.msra.mxu0 %v245
    %960 = vmatpush.msra.mxu0 %v241
    %961 = vmatpush.msra.mxu0 %v237
    %962 = vmatpush.msra.mxu0 %v233
    %963 = vmatpush.msra.mxu0 %v229
    %964 = vmatpush.msra.mxu0 %v225
    %965 = vmatpush.msra.mxu0 %v221
    %966 = vmatpush.msra.mxu0 %v217
    %967 = vmatpush.msra.mxu0 %v213
    %968 = vmatpush.msra.mxu0 %v209
    %969 = vmatpush.msra.mxu0 %v205
    %970 = vmatpush.msra.mxu0 %v201
    %971 = vmatpush.msra.mxu0 %v197
    %972 = vmatpush.msra.mxu0 %v193
    %973 = vmatmul.f32.gmra.mxu0 %v915
    %v974 = vpop.f32.mrf.mxu0
    %v975 = vadd.f32 0.0, %v974
    %976 = vdwg.mxu0
    %977 = vmatpush.msra.mxu0 %v254
    %978 = vmatpush.msra.mxu0 %v250
    %979 = vmatpush.msra.mxu0 %v246
    %980 = vmatpush.msra.mxu0 %v242
    %981 = vmatpush.msra.mxu0 %v238
    %982 = vmatpush.msra.mxu0 %v234
    %983 = vmatpush.msra.mxu0 %v230
    %984 = vmatpush.msra.mxu0 %v226
    %985 = vmatpush.msra.mxu0 %v222
    %986 = vmatpush.msra.mxu0 %v218
    %987 = vmatpush.msra.mxu0 %v214
    %988 = vmatpush.msra.mxu0 %v210
    %989 = vmatpush.msra.mxu0 %v206
    %990 = vmatpush.msra.mxu0 %v202
    %991 = vmatpush.msra.mxu0 %v198
    %992 = vmatpush.msra.mxu0 %v194
    %993 = vmatmul.f32.gmra.mxu0 %v915
    %v994 = vpop.f32.mrf.mxu0
    %v995 = vadd.f32 0.0, %v994
    %996 = vdwg.mxu0
    %v997 = vadd.f32 %v910, %v935
    %v998 = vadd.f32 %v911, %v955
    %v999 = vadd.f32 %v912, %v975
    %v1000 = vadd.f32 %v913, %v995
    %v1001 = vxor.u32 %v997, 2147483648
    %v1002 = vxor.u32 %v998, 2147483648
    %v1003 = vxor.u32 %v1000, 2147483648
    %v1004 = vmul.f32 %v1001, 1.442695
    %v1005 = vpow.pop %v1004
    %v1006 = vmul.f32 %v1002, 1.442695
    %v1007 = vpow.pop %v1006
    %v1008 = vmul.f32 %v1003, 1.442695
    %v1009 = vpow.pop %v1008
    %v1010 = vadd.f32 %v1005, 1.0
    %v1011 = vadd.f32 %v1007, 1.0
    %v1012 = vadd.f32 %v1009, 1.0
    %v1013 = vrcp.pop %v1010
    %v1014 = vmul.f32 %v1010, %v1013
    %v1015 = vsub.f32 1.0, %v1014
    %v1016 = vmul.f32 %v1013, %v1015
    %v1017 = vadd.f32 %v1013, %v1016
    %vm1018 = vweird.f32 %v1010
    %vm1019 = vweird.f32 %v1013
    %vm1020 = vmor %vm1018, %vm1019
    %v1021 = vsel %vm1020, %v1013, %v1017
    %v1022 = vand.u32 2147483647, %v1010
    %vm1023 = vcmp.eq.f32.partialorder %v1022, 8.507059e+37
    %v1024 = vand.u32 %v1010, 2147483648
    %v1025 = vor.u32 1.1754944e-38, %v1024
    %v1026 = vsel %vm1023, %v1025, %v1021
    %v1027 = vmul.f32 1.0, %v1026
    %v1028 = vrcp.pop %v1011
    %v1029 = vmul.f32 %v1011, %v1028
    %v1030 = vsub.f32 1.0, %v1029
    %v1031 = vmul.f32 %v1028, %v1030
    %v1032 = vadd.f32 %v1028, %v1031
    %vm1033 = vweird.f32 %v1011
    %vm1034 = vweird.f32 %v1028
    %vm1035 = vmor %vm1033, %vm1034
    %v1036 = vsel %vm1035, %v1028, %v1032
    %v1037 = vand.u32 2147483647, %v1011
    %vm1038 = vcmp.eq.f32.partialorder %v1037, 8.507059e+37
    %v1039 = vand.u32 %v1011, 2147483648
    %v1040 = vor.u32 1.1754944e-38, %v1039
    %v1041 = vsel %vm1038, %v1040, %v1036
    %v1042 = vmul.f32 1.0, %v1041
    %v1043 = vrcp.pop %v1012
    %v1044 = vmul.f32 %v1012, %v1043
    %v1045 = vsub.f32 1.0, %v1044
    %v1046 = vmul.f32 %v1043, %v1045
    %v1047 = vadd.f32 %v1043, %v1046
    %vm1048 = vweird.f32 %v1012
    %vm1049 = vweird.f32 %v1043
    %vm1050 = vmor %vm1048, %vm1049
    %v1051 = vsel %vm1050, %v1043, %v1047
    %v1052 = vand.u32 2147483647, %v1012
    %vm1053 = vcmp.eq.f32.partialorder %v1052, 8.507059e+37
    %v1054 = vand.u32 %v1012, 2147483648
    %v1055 = vor.u32 1.1754944e-38, %v1054
    %v1056 = vsel %vm1053, %v1055, %v1051
    %v1057 = vmul.f32 1.0, %v1056
    %v1058 = vtanh.pop %v999
    %v1060 = vrot.slane %v907, 6
    %v1062 = vmul.f32 %v1042, %v1060
    %v1063 = vmul.f32 %v1027, %v1058
    %v1064 = vadd.f32 %v1062, %v1063
    %v1065 = vtanh.pop %v1064
    %v1066 = vmul.f32 %v1057, %v1065
    %v1067 = vld [vmem:[#allocation2 + $0x20] sm:$0xc]
    %v1068 = vld [vmem:[#allocation2 + $0x28] sm:$0xc]
    %v1069 = vld [vmem:[#allocation2 + $0x30] sm:$0xc]
    %v1070 = vld [vmem:[#allocation2 + $0x38] sm:$0xc]
    %1071 = vmatpush.msra.mxu0 %v251
    %1072 = vmatpush.msra.mxu0 %v247
    %1073 = vmatpush.msra.mxu0 %v243
    %1074 = vmatpush.msra.mxu0 %v239
    %1075 = vmatpush.msra.mxu0 %v235
    %1076 = vmatpush.msra.mxu0 %v231
    %1077 = vmatpush.msra.mxu0 %v227
    %1078 = vmatpush.msra.mxu0 %v223
    %1079 = vmatpush.msra.mxu0 %v219
    %1080 = vmatpush.msra.mxu0 %v215
    %1081 = vmatpush.msra.mxu0 %v211
    %1082 = vmatpush.msra.mxu0 %v207
    %1083 = vmatpush.msra.mxu0 %v203
    %1084 = vmatpush.msra.mxu0 %v199
    %1085 = vmatpush.msra.mxu0 %v195
    %1086 = vmatpush.msra.mxu0 %v191
    %1087 = vmatmul.f32.gmra.mxu0 %v1066
    %v1088 = vpop.f32.mrf.mxu0
    %v1089 = vadd.f32 0.0, %v1088
    %1090 = vdwg.mxu0
    %1091 = vmatpush.msra.mxu0 %v252
    %1092 = vmatpush.msra.mxu0 %v248
    %1093 = vmatpush.msra.mxu0 %v244
    %1094 = vmatpush.msra.mxu0 %v240
    %1095 = vmatpush.msra.mxu0 %v236
    %1096 = vmatpush.msra.mxu0 %v232
    %1097 = vmatpush.msra.mxu0 %v228
    %1098 = vmatpush.msra.mxu0 %v224
    %1099 = vmatpush.msra.mxu0 %v220
    %1100 = vmatpush.msra.mxu0 %v216
    %1101 = vmatpush.msra.mxu0 %v212
    %1102 = vmatpush.msra.mxu0 %v208
    %1103 = vmatpush.msra.mxu0 %v204
    %1104 = vmatpush.msra.mxu0 %v200
    %1105 = vmatpush.msra.mxu0 %v196
    %1106 = vmatpush.msra.mxu0 %v192
    %1107 = vmatmul.f32.gmra.mxu0 %v1066
    %v1108 = vpop.f32.mrf.mxu0
    %v1109 = vadd.f32 0.0, %v1108
    %1110 = vdwg.mxu0
    %1111 = vmatpush.msra.mxu0 %v253
    %1112 = vmatpush.msra.mxu0 %v249
    %1113 = vmatpush.msra.mxu0 %v245
    %1114 = vmatpush.msra.mxu0 %v241
    %1115 = vmatpush.msra.mxu0 %v237
    %1116 = vmatpush.msra.mxu0 %v233
    %1117 = vmatpush.msra.mxu0 %v229
    %1118 = vmatpush.msra.mxu0 %v225
    %1119 = vmatpush.msra.mxu0 %v221
    %1120 = vmatpush.msra.mxu0 %v217
    %1121 = vmatpush.msra.mxu0 %v213
    %1122 = vmatpush.msra.mxu0 %v209
    %1123 = vmatpush.msra.mxu0 %v205
    %1124 = vmatpush.msra.mxu0 %v201
    %1125 = vmatpush.msra.mxu0 %v197
    %1126 = vmatpush.msra.mxu0 %v193
    %1127 = vmatmul.f32.gmra.mxu0 %v1066
    %v1128 = vpop.f32.mrf.mxu0
    %v1129 = vadd.f32 0.0, %v1128
    %1130 = vdwg.mxu0
    %1131 = vmatpush.msra.mxu0 %v254
    %1132 = vmatpush.msra.mxu0 %v250
    %1133 = vmatpush.msra.mxu0 %v246
    %1134 = vmatpush.msra.mxu0 %v242
    %1135 = vmatpush.msra.mxu0 %v238
    %1136 = vmatpush.msra.mxu0 %v234
    %1137 = vmatpush.msra.mxu0 %v230
    %1138 = vmatpush.msra.mxu0 %v226
    %1139 = vmatpush.msra.mxu0 %v222
    %1140 = vmatpush.msra.mxu0 %v218
    %1141 = vmatpush.msra.mxu0 %v214
    %1142 = vmatpush.msra.mxu0 %v210
    %1143 = vmatpush.msra.mxu0 %v206
    %1144 = vmatpush.msra.mxu0 %v202
    %1145 = vmatpush.msra.mxu0 %v198
    %1146 = vmatpush.msra.mxu0 %v194
    %1147 = vmatmul.f32.gmra.mxu0 %v1066
    %v1148 = vpop.f32.mrf.mxu0
    %v1149 = vadd.f32 0.0, %v1148
    %1150 = vdwg.mxu0
    %v1155 = vrot.slane %v1089, 6
    %v1156 = vrot.slane %v1109, 6
    %v1157 = vrot.slane %v1129, 6
    %v1158 = vrot.slane %v1149, 6
    %v1163 = vadd.f32 %v1067, %v1155
    %v1164 = vadd.f32 %v1068, %v1156
    %v1165 = vadd.f32 %v1069, %v1157
    %v1166 = vadd.f32 %v1070, %v1158
    %v1167 = vxor.u32 %v1163, 2147483648
    %v1168 = vxor.u32 %v1164, 2147483648
    %v1169 = vxor.u32 %v1166, 2147483648
    %v1170 = vmul.f32 %v1167, 1.442695
    %v1171 = vpow.pop %v1170
    %v1172 = vmul.f32 %v1168, 1.442695
    %v1173 = vpow.pop %v1172
    %v1174 = vmul.f32 %v1169, 1.442695
    %v1175 = vpow.pop %v1174
    %v1176 = vadd.f32 %v1171, 1.0
    %v1177 = vadd.f32 %v1173, 1.0
    %v1178 = vadd.f32 %v1175, 1.0
    %v1179 = vrcp.pop %v1176
    %v1180 = vmul.f32 %v1176, %v1179
    %v1181 = vsub.f32 1.0, %v1180
    %v1182 = vmul.f32 %v1179, %v1181
    %v1183 = vadd.f32 %v1179, %v1182
    %vm1184 = vweird.f32 %v1176
    %vm1185 = vweird.f32 %v1179
    %vm1186 = vmor %vm1184, %vm1185
    %v1187 = vsel %vm1186, %v1179, %v1183
    %v1188 = vand.u32 2147483647, %v1176
    %vm1189 = vcmp.eq.f32.partialorder %v1188, 8.507059e+37
    %v1190 = vand.u32 %v1176, 2147483648
    %v1191 = vor.u32 1.1754944e-38, %v1190
    %v1192 = vsel %vm1189, %v1191, %v1187
    %v1193 = vmul.f32 1.0, %v1192
    %v1194 = vrcp.pop %v1177
    %v1195 = vmul.f32 %v1177, %v1194
    %v1196 = vsub.f32 1.0, %v1195
    %v1197 = vmul.f32 %v1194, %v1196
    %v1198 = vadd.f32 %v1194, %v1197
    %vm1199 = vweird.f32 %v1177
    %vm1200 = vweird.f32 %v1194
    %vm1201 = vmor %vm1199, %vm1200
    %v1202 = vsel %vm1201, %v1194, %v1198
    %v1203 = vand.u32 2147483647, %v1177
    %vm1204 = vcmp.eq.f32.partialorder %v1203, 8.507059e+37
    %v1205 = vand.u32 %v1177, 2147483648
    %v1206 = vor.u32 1.1754944e-38, %v1205
    %v1207 = vsel %vm1204, %v1206, %v1202
    %v1208 = vmul.f32 1.0, %v1207
    %v1209 = vrcp.pop %v1178
    %v1210 = vmul.f32 %v1178, %v1209
    %v1211 = vsub.f32 1.0, %v1210
    %v1212 = vmul.f32 %v1209, %v1211
    %v1213 = vadd.f32 %v1209, %v1212
    %vm1214 = vweird.f32 %v1178
    %vm1215 = vweird.f32 %v1209
    %vm1216 = vmor %vm1214, %vm1215
    %v1217 = vsel %vm1216, %v1209, %v1213
    %v1218 = vand.u32 2147483647, %v1178
    %vm1219 = vcmp.eq.f32.partialorder %v1218, 8.507059e+37
    %v1220 = vand.u32 %v1178, 2147483648
    %v1221 = vor.u32 1.1754944e-38, %v1220
    %v1222 = vsel %vm1219, %v1221, %v1217
    %v1223 = vmul.f32 1.0, %v1222
    %v1224 = vtanh.pop %v1165
    %v1226 = vrot.slane %v1064, 6
    %v1228 = vmul.f32 %v1208, %v1226
    %v1229 = vmul.f32 %v1193, %v1224
    %v1230 = vadd.f32 %v1228, %v1229
    %v1231 = vtanh.pop %v1230
    %v1232 = vmul.f32 %v1223, %v1231
    %v1233 = vld [vmem:[#allocation2 + $0x20] sm:$0x30]
    %v1234 = vld [vmem:[#allocation2 + $0x28] sm:$0x30]
    %v1235 = vld [vmem:[#allocation2 + $0x30] sm:$0x30]
    %v1236 = vld [vmem:[#allocation2 + $0x38] sm:$0x30]
    %v1238 = vrot.slane %v1232, 2
    %1240 = vmatpush.msra.mxu0 %v251
    %1241 = vmatpush.msra.mxu0 %v247
    %1242 = vmatpush.msra.mxu0 %v243
    %1243 = vmatpush.msra.mxu0 %v239
    %1244 = vmatpush.msra.mxu0 %v235
    %1245 = vmatpush.msra.mxu0 %v231
    %1246 = vmatpush.msra.mxu0 %v227
    %1247 = vmatpush.msra.mxu0 %v223
    %1248 = vmatpush.msra.mxu0 %v219
    %1249 = vmatpush.msra.mxu0 %v215
    %1250 = vmatpush.msra.mxu0 %v211
    %1251 = vmatpush.msra.mxu0 %v207
    %1252 = vmatpush.msra.mxu0 %v203
    %1253 = vmatpush.msra.mxu0 %v199
    %1254 = vmatpush.msra.mxu0 %v195
    %1255 = vmatpush.msra.mxu0 %v191
    %1256 = vmatmul.f32.gmra.mxu0 %v1238
    %v1257 = vpop.f32.mrf.mxu0
    %v1258 = vadd.f32 0.0, %v1257
    %1259 = vdwg.mxu0
    %1260 = vmatpush.msra.mxu0 %v252
    %1261 = vmatpush.msra.mxu0 %v248
    %1262 = vmatpush.msra.mxu0 %v244
    %1263 = vmatpush.msra.mxu0 %v240
    %1264 = vmatpush.msra.mxu0 %v236
    %1265 = vmatpush.msra.mxu0 %v232
    %1266 = vmatpush.msra.mxu0 %v228
    %1267 = vmatpush.msra.mxu0 %v224
    %1268 = vmatpush.msra.mxu0 %v220
    %1269 = vmatpush.msra.mxu0 %v216
    %1270 = vmatpush.msra.mxu0 %v212
    %1271 = vmatpush.msra.mxu0 %v208
    %1272 = vmatpush.msra.mxu0 %v204
    %1273 = vmatpush.msra.mxu0 %v200
    %1274 = vmatpush.msra.mxu0 %v196
    %1275 = vmatpush.msra.mxu0 %v192
    %1276 = vmatmul.f32.gmra.mxu0 %v1238
    %v1277 = vpop.f32.mrf.mxu0
    %v1278 = vadd.f32 0.0, %v1277
    %1279 = vdwg.mxu0
    %1280 = vmatpush.msra.mxu0 %v253
    %1281 = vmatpush.msra.mxu0 %v249
    %1282 = vmatpush.msra.mxu0 %v245
    %1283 = vmatpush.msra.mxu0 %v241
    %1284 = vmatpush.msra.mxu0 %v237
    %1285 = vmatpush.msra.mxu0 %v233
    %1286 = vmatpush.msra.mxu0 %v229
    %1287 = vmatpush.msra.mxu0 %v225
    %1288 = vmatpush.msra.mxu0 %v221
    %1289 = vmatpush.msra.mxu0 %v217
    %1290 = vmatpush.msra.mxu0 %v213
    %1291 = vmatpush.msra.mxu0 %v209
    %1292 = vmatpush.msra.mxu0 %v205
    %1293 = vmatpush.msra.mxu0 %v201
    %1294 = vmatpush.msra.mxu0 %v197
    %1295 = vmatpush.msra.mxu0 %v193
    %1296 = vmatmul.f32.gmra.mxu0 %v1238
    %v1297 = vpop.f32.mrf.mxu0
    %v1298 = vadd.f32 0.0, %v1297
    %1299 = vdwg.mxu0
    %1300 = vmatpush.msra.mxu0 %v254
    %1301 = vmatpush.msra.mxu0 %v250
    %1302 = vmatpush.msra.mxu0 %v246
    %1303 = vmatpush.msra.mxu0 %v242
    %1304 = vmatpush.msra.mxu0 %v238
    %1305 = vmatpush.msra.mxu0 %v234
    %1306 = vmatpush.msra.mxu0 %v230
    %1307 = vmatpush.msra.mxu0 %v226
    %1308 = vmatpush.msra.mxu0 %v222
    %1309 = vmatpush.msra.mxu0 %v218
    %1310 = vmatpush.msra.mxu0 %v214
    %1311 = vmatpush.msra.mxu0 %v210
    %1312 = vmatpush.msra.mxu0 %v206
    %1313 = vmatpush.msra.mxu0 %v202
    %1314 = vmatpush.msra.mxu0 %v198
    %1315 = vmatpush.msra.mxu0 %v194
    %1316 = vmatmul.f32.gmra.mxu0 %v1238
    %v1317 = vpop.f32.mrf.mxu0
    %v1318 = vadd.f32 0.0, %v1317
    %1319 = vdwg.mxu0
    %v1324 = vrot.slane %v1258, 4
    %v1325 = vrot.slane %v1278, 4
    %v1326 = vrot.slane %v1298, 4
    %v1327 = vrot.slane %v1318, 4
    %v1332 = vadd.f32 %v1233, %v1324
    %v1333 = vadd.f32 %v1234, %v1325
    %v1334 = vadd.f32 %v1235, %v1326
    %v1335 = vadd.f32 %v1236, %v1327
    %v1336 = vxor.u32 %v1332, 2147483648
    %v1337 = vxor.u32 %v1333, 2147483648
    %v1338 = vxor.u32 %v1335, 2147483648
    %v1339 = vmul.f32 %v1336, 1.442695
    %v1340 = vpow.pop %v1339
    %v1341 = vmul.f32 %v1337, 1.442695
    %v1342 = vpow.pop %v1341
    %v1343 = vmul.f32 %v1338, 1.442695
    %v1344 = vpow.pop %v1343
    %v1345 = vadd.f32 %v1340, 1.0
    %v1346 = vadd.f32 %v1342, 1.0
    %v1347 = vadd.f32 %v1344, 1.0
    %v1348 = vrcp.pop %v1345
    %v1349 = vmul.f32 %v1345, %v1348
    %v1350 = vsub.f32 1.0, %v1349
    %v1351 = vmul.f32 %v1348, %v1350
    %v1352 = vadd.f32 %v1348, %v1351
    %vm1353 = vweird.f32 %v1345
    %vm1354 = vweird.f32 %v1348
    %vm1355 = vmor %vm1353, %vm1354
    %v1356 = vsel %vm1355, %v1348, %v1352
    %v1357 = vand.u32 2147483647, %v1345
    %vm1358 = vcmp.eq.f32.partialorder %v1357, 8.507059e+37
    %v1359 = vand.u32 %v1345, 2147483648
    %v1360 = vor.u32 1.1754944e-38, %v1359
    %v1361 = vsel %vm1358, %v1360, %v1356
    %v1362 = vmul.f32 1.0, %v1361
    %v1363 = vrcp.pop %v1346
    %v1364 = vmul.f32 %v1346, %v1363
    %v1365 = vsub.f32 1.0, %v1364
    %v1366 = vmul.f32 %v1363, %v1365
    %v1367 = vadd.f32 %v1363, %v1366
    %vm1368 = vweird.f32 %v1346
    %vm1369 = vweird.f32 %v1363
    %vm1370 = vmor %vm1368, %vm1369
    %v1371 = vsel %vm1370, %v1363, %v1367
    %v1372 = vand.u32 2147483647, %v1346
    %vm1373 = vcmp.eq.f32.partialorder %v1372, 8.507059e+37
    %v1374 = vand.u32 %v1346, 2147483648
    %v1375 = vor.u32 1.1754944e-38, %v1374
    %v1376 = vsel %vm1373, %v1375, %v1371
    %v1377 = vmul.f32 1.0, %v1376
    %v1378 = vrcp.pop %v1347
    %v1379 = vmul.f32 %v1347, %v1378
    %v1380 = vsub.f32 1.0, %v1379
    %v1381 = vmul.f32 %v1378, %v1380
    %v1382 = vadd.f32 %v1378, %v1381
    %vm1383 = vweird.f32 %v1347
    %vm1384 = vweird.f32 %v1378
    %vm1385 = vmor %vm1383, %vm1384
    %v1386 = vsel %vm1385, %v1378, %v1382
    %v1387 = vand.u32 2147483647, %v1347
    %vm1388 = vcmp.eq.f32.partialorder %v1387, 8.507059e+37
    %v1389 = vand.u32 %v1347, 2147483648
    %v1390 = vor.u32 1.1754944e-38, %v1389
    %v1391 = vsel %vm1388, %v1390, %v1386
    %v1392 = vmul.f32 1.0, %v1391
    %v1393 = vtanh.pop %v1334
    %v1395 = vrot.slane %v1230, 6
    %v1397 = vmul.f32 %v1377, %v1395
    %v1398 = vmul.f32 %v1362, %v1393
    %v1399 = vadd.f32 %v1397, %v1398
    %v1400 = vtanh.pop %v1399
    %v1401 = vmul.f32 %v1392, %v1400
    %v1402 = vld [vmem:[#allocation2 + $0x20] sm:$0xc0]
    %v1403 = vld [vmem:[#allocation2 + $0x28] sm:$0xc0]
    %v1404 = vld [vmem:[#allocation2 + $0x30] sm:$0xc0]
    %v1405 = vld [vmem:[#allocation2 + $0x38] sm:$0xc0]
    %v1407 = vrot.slane %v1401, 4
    %1409 = vmatpush.msra.mxu0 %v251
    %1410 = vmatpush.msra.mxu0 %v247
    %1411 = vmatpush.msra.mxu0 %v243
    %1412 = vmatpush.msra.mxu0 %v239
    %1413 = vmatpush.msra.mxu0 %v235
    %1414 = vmatpush.msra.mxu0 %v231
    %1415 = vmatpush.msra.mxu0 %v227
    %1416 = vmatpush.msra.mxu0 %v223
    %1417 = vmatpush.msra.mxu0 %v219
    %1418 = vmatpush.msra.mxu0 %v215
    %1419 = vmatpush.msra.mxu0 %v211
    %1420 = vmatpush.msra.mxu0 %v207
    %1421 = vmatpush.msra.mxu0 %v203
    %1422 = vmatpush.msra.mxu0 %v199
    %1423 = vmatpush.msra.mxu0 %v195
    %1424 = vmatpush.msra.mxu0 %v191
    %1425 = vmatmul.f32.gmra.mxu0 %v1407
    %v1426 = vpop.f32.mrf.mxu0
    %v1427 = vadd.f32 0.0, %v1426
    %1428 = vdwg.mxu0
    %1429 = vmatpush.msra.mxu0 %v252
    %1430 = vmatpush.msra.mxu0 %v248
    %1431 = vmatpush.msra.mxu0 %v244
    %1432 = vmatpush.msra.mxu0 %v240
    %1433 = vmatpush.msra.mxu0 %v236
    %1434 = vmatpush.msra.mxu0 %v232
    %1435 = vmatpush.msra.mxu0 %v228
    %1436 = vmatpush.msra.mxu0 %v224
    %1437 = vmatpush.msra.mxu0 %v220
    %1438 = vmatpush.msra.mxu0 %v216
    %1439 = vmatpush.msra.mxu0 %v212
    %1440 = vmatpush.msra.mxu0 %v208
    %1441 = vmatpush.msra.mxu0 %v204
    %1442 = vmatpush.msra.mxu0 %v200
    %1443 = vmatpush.msra.mxu0 %v196
    %1444 = vmatpush.msra.mxu0 %v192
    %1445 = vmatmul.f32.gmra.mxu0 %v1407
    %v1446 = vpop.f32.mrf.mxu0
    %v1447 = vadd.f32 0.0, %v1446
    %1448 = vdwg.mxu0
    %1449 = vmatpush.msra.mxu0 %v253
    %1450 = vmatpush.msra.mxu0 %v249
    %1451 = vmatpush.msra.mxu0 %v245
    %1452 = vmatpush.msra.mxu0 %v241
    %1453 = vmatpush.msra.mxu0 %v237
    %1454 = vmatpush.msra.mxu0 %v233
    %1455 = vmatpush.msra.mxu0 %v229
    %1456 = vmatpush.msra.mxu0 %v225
    %1457 = vmatpush.msra.mxu0 %v221
    %1458 = vmatpush.msra.mxu0 %v217
    %1459 = vmatpush.msra.mxu0 %v213
    %1460 = vmatpush.msra.mxu0 %v209
    %1461 = vmatpush.msra.mxu0 %v205
    %1462 = vmatpush.msra.mxu0 %v201
    %1463 = vmatpush.msra.mxu0 %v197
    %1464 = vmatpush.msra.mxu0 %v193
    %1465 = vmatmul.f32.gmra.mxu0 %v1407
    %v1466 = vpop.f32.mrf.mxu0
    %v1467 = vadd.f32 0.0, %v1466
    %1468 = vdwg.mxu0
    %1469 = vmatpush.msra.mxu0 %v254
    %1470 = vmatpush.msra.mxu0 %v250
    %1471 = vmatpush.msra.mxu0 %v246
    %1472 = vmatpush.msra.mxu0 %v242
    %1473 = vmatpush.msra.mxu0 %v238
    %1474 = vmatpush.msra.mxu0 %v234
    %1475 = vmatpush.msra.mxu0 %v230
    %1476 = vmatpush.msra.mxu0 %v226
    %1477 = vmatpush.msra.mxu0 %v222
    %1478 = vmatpush.msra.mxu0 %v218
    %1479 = vmatpush.msra.mxu0 %v214
    %1480 = vmatpush.msra.mxu0 %v210
    %1481 = vmatpush.msra.mxu0 %v206
    %1482 = vmatpush.msra.mxu0 %v202
    %1483 = vmatpush.msra.mxu0 %v198
    %1484 = vmatpush.msra.mxu0 %v194
    %1485 = vmatmul.f32.gmra.mxu0 %v1407
    %v1486 = vpop.f32.mrf.mxu0
    %v1487 = vadd.f32 0.0, %v1486
    %1488 = vdwg.mxu0
    %v1493 = vrot.slane %v1427, 2
    %v1494 = vrot.slane %v1447, 2
    %v1495 = vrot.slane %v1467, 2
    %v1496 = vrot.slane %v1487, 2
    %v1501 = vadd.f32 %v1402, %v1493
    %v1502 = vadd.f32 %v1403, %v1494
    %v1503 = vadd.f32 %v1404, %v1495
    %v1504 = vadd.f32 %v1405, %v1496
    %v1505 = vxor.u32 %v1501, 2147483648
    %v1506 = vxor.u32 %v1502, 2147483648
    %v1507 = vxor.u32 %v1504, 2147483648
    %v1508 = vmul.f32 %v1505, 1.442695
    %v1509 = vpow.pop %v1508
    %v1510 = vmul.f32 %v1506, 1.442695
    %v1511 = vpow.pop %v1510
    %v1512 = vmul.f32 %v1507, 1.442695
    %v1513 = vpow.pop %v1512
    %v1514 = vadd.f32 %v1509, 1.0
    %v1515 = vadd.f32 %v1511, 1.0
    %v1516 = vadd.f32 %v1513, 1.0
    %v1517 = vrcp.pop %v1514
    %v1518 = vmul.f32 %v1514, %v1517
    %v1519 = vsub.f32 1.0, %v1518
    %v1520 = vmul.f32 %v1517, %v1519
    %v1521 = vadd.f32 %v1517, %v1520
    %vm1522 = vweird.f32 %v1514
    %vm1523 = vweird.f32 %v1517
    %vm1524 = vmor %vm1522, %vm1523
    %v1525 = vsel %vm1524, %v1517, %v1521
    %v1526 = vand.u32 2147483647, %v1514
    %vm1527 = vcmp.eq.f32.partialorder %v1526, 8.507059e+37
    %v1528 = vand.u32 %v1514, 2147483648
    %v1529 = vor.u32 1.1754944e-38, %v1528
    %v1530 = vsel %vm1527, %v1529, %v1525
    %v1531 = vmul.f32 1.0, %v1530
    %v1532 = vrcp.pop %v1515
    %v1533 = vmul.f32 %v1515, %v1532
    %v1534 = vsub.f32 1.0, %v1533
    %v1535 = vmul.f32 %v1532, %v1534
    %v1536 = vadd.f32 %v1532, %v1535
    %vm1537 = vweird.f32 %v1515
    %vm1538 = vweird.f32 %v1532
    %vm1539 = vmor %vm1537, %vm1538
    %v1540 = vsel %vm1539, %v1532, %v1536
    %v1541 = vand.u32 2147483647, %v1515
    %vm1542 = vcmp.eq.f32.partialorder %v1541, 8.507059e+37
    %v1543 = vand.u32 %v1515, 2147483648
    %v1544 = vor.u32 1.1754944e-38, %v1543
    %v1545 = vsel %vm1542, %v1544, %v1540
    %v1546 = vmul.f32 1.0, %v1545
    %v1547 = vrcp.pop %v1516
    %v1548 = vmul.f32 %v1516, %v1547
    %v1549 = vsub.f32 1.0, %v1548
    %v1550 = vmul.f32 %v1547, %v1549
    %v1551 = vadd.f32 %v1547, %v1550
    %vm1552 = vweird.f32 %v1516
    %vm1553 = vweird.f32 %v1547
    %vm1554 = vmor %vm1552, %vm1553
    %v1555 = vsel %vm1554, %v1547, %v1551
    %v1556 = vand.u32 2147483647, %v1516
    %vm1557 = vcmp.eq.f32.partialorder %v1556, 8.507059e+37
    %v1558 = vand.u32 %v1516, 2147483648
    %v1559 = vor.u32 1.1754944e-38, %v1558
    %v1560 = vsel %vm1557, %v1559, %v1555
    %v1561 = vmul.f32 1.0, %v1560
    %v1562 = vtanh.pop %v1503
    %v1564 = vrot.slane %v1399, 6
    %v1566 = vmul.f32 %v1546, %v1564
    %v1567 = vmul.f32 %v1531, %v1562
    %v1568 = vadd.f32 %v1566, %v1567
    %v1569 = vtanh.pop %v1568
    %v1570 = vmul.f32 %v1561, %v1569
    %v1571 = vld [vmem:[#allocation6] sm:$0xff]
    %v1572 = vld [vmem:[#allocation6 + $0x8] sm:$0xff]
    %v1573 = vld [vmem:[#allocation6 + $0x10] sm:$0xff]
    %v1574 = vld [vmem:[#allocation6 + $0x18] sm:$0xff]
    %v1575 = vld [vmem:[#allocation6 + $0x20] sm:$0xff]
    %v1576 = vld [vmem:[#allocation6 + $0x28] sm:$0xff]
    %v1577 = vld [vmem:[#allocation6 + $0x30] sm:$0xff]
    %v1578 = vld [vmem:[#allocation6 + $0x38] sm:$0xff]
    %v1579 = vld [vmem:[#allocation6 + $0x40] sm:$0xff]
    %v1580 = vld [vmem:[#allocation6 + $0x48] sm:$0xff]
    %v1581 = vld [vmem:[#allocation6 + $0x50] sm:$0xff]
    %v1582 = vld [vmem:[#allocation6 + $0x58] sm:$0xff]
    %v1583 = vld [vmem:[#allocation6 + $0x60] sm:$0xff]
    %v1584 = vld [vmem:[#allocation6 + $0x68] sm:$0xff]
    %v1585 = vld [vmem:[#allocation6 + $0x70] sm:$0xff]
    %v1586 = vld [vmem:[#allocation6 + $0x78] sm:$0xff]
    %v1587 = vld [vmem:[%s5] sm:$0x1]
    %v1589 = vperm.slane %v1587, 0
    %v1592 = vrot.slane %v1570, 6
    %1594 = vmatpush.msra.mxu0 %v1586
    %1595 = vmatpush.msra.mxu0 %v1585
    %1596 = vmatpush.msra.mxu0 %v1584
    %1597 = vmatpush.msra.mxu0 %v1583
    %1598 = vmatpush.msra.mxu0 %v1582
    %1599 = vmatpush.msra.mxu0 %v1581
    %1600 = vmatpush.msra.mxu0 %v1580
    %1601 = vmatpush.msra.mxu0 %v1579
    %1602 = vmatpush.msra.mxu0 %v1578
    %1603 = vmatpush.msra.mxu0 %v1577
    %1604 = vmatpush.msra.mxu0 %v1576
    %1605 = vmatpush.msra.mxu0 %v1575
    %1606 = vmatpush.msra.mxu0 %v1574
    %1607 = vmatpush.msra.mxu0 %v1573
    %1608 = vmatpush.msra.mxu0 %v1572
    %1609 = vmatpush.msra.mxu0 %v1571
    %1610 = vmatmul.f32.gmra.mxu0 %v1592
    %v1611 = vpop.f32.mrf.mxu0
    %v1612 = vadd.f32 %v1589, %v1611
    %1613 = vdwg.mxu0
    %v1614 = vxor.u32 %v1612, 2147483648
    %v1615 = vmul.f32 %v1614, 1.442695
    %v1616 = vpow.pop %v1615
    %v1617 = vadd.f32 %v1616, 1.0
    %v1618 = vrcp.pop %v1617
    %v1619 = vmul.f32 %v1617, %v1618
    %v1620 = vsub.f32 1.0, %v1619
    %v1621 = vmul.f32 %v1618, %v1620
    %v1622 = vadd.f32 %v1618, %v1621
    %vm1623 = vweird.f32 %v1617
    %vm1624 = vweird.f32 %v1618
    %vm1625 = vmor %vm1623, %vm1624
    %v1626 = vsel %vm1625, %v1618, %v1622
    %v1627 = vand.u32 2147483647, %v1617
    %vm1628 = vcmp.eq.f32.partialorder %v1627, 8.507059e+37
    %v1629 = vand.u32 %v1617, 2147483648
    %v1630 = vor.u32 1.1754944e-38, %v1629
    %v1631 = vsel %vm1628, %v1630, %v1626
    %v1632 = vmul.f32 1.0, %v1631
    %1633 = vst [vmem:[#allocation8] sm:$0x3] %v1632
    // Predicated region
    $region34: #{tpu_custom_call.1} parent=1 // pred_check
      _
    $region35: #{tpu_custom_call.1} parent=1 // pred_check_branch
      %1635 = sbr.rel (0) target = $region37
    $region36: #{tpu_custom_call.1} parent=1 // pred_region
      %1637 = vsyncadd [#allocation5], 0
      %s1639 = sshll.u32 [#allocation8], 4
      %s1640 = int_to_ptr.vmem [resolvable:$true] %s1639
      %s1641 = sshll.u32 %s6, 4
      %s1642 = int_to_ptr.hbm [resolvable:$true] %s1641
      %1644 = dma.vmem_to_hbm [thread:$0]  %s1640, 32, %s1642, [#allocation5]
    $region37: #{tpu_custom_call.1} parent=1 // pred_fallthru
      _
    // Predicated region
    $region38: #{tpu_custom_call.1} parent=1 // pred_check
      _
    $region39: #{tpu_custom_call.1} parent=1 // pred_check_branch
      %1646 = sbr.rel (0) target = $region41
    $region40: #{tpu_custom_call.1} parent=1 // pred_region
      %1648 = dma.done [#allocation5], 32
    $region41: #{tpu_custom_call.1} parent=1 // pred_fallthru
      _
    %1649 = vsyncpa [#allocation4], 1
    %1650 = vsyncpa [#allocation7], 1
    %1651 = vsyncpa [#allocation5], 1

</llo_original>
